<compile_context>
chip_gen: v6e
topology: v6e:2x2x1
jax: 0.10.0
libtpu: 0.0.40
codegen_flags: <defaults>
</compile_context>

<pallas_src>
import math

import numpy as np
import jax
import jax.numpy as jnp
from jax import lax
from jax.experimental import pallas as pl
from jax.experimental.pallas import tpu as pltpu

WINDOW_SIZE = 11
SIGMA = 1.5
C1 = 0.01 ** 2
C2 = 0.03 ** 2


def _gauss_taps(window_size=WINDOW_SIZE, sigma=SIGMA):
    # same as gaussian1() in the PyTorch reference
    g = [math.exp(-((x - window_size // 2) ** 2) / float(2 * sigma ** 2))
         for x in range(window_size)]
    s = sum(g)
    return [v / s for v in g]


def _band_matrix(n, taps, p):
    """Banded matrix M with M[k, j] = taps[(k - j) + p] (|k-j| <= p), else 0.

    Right-multiplying x (rows, n) by M performs the 1-D Gaussian conv along the
    last axis with the zero 'SAME' padding folded into the band (taps are
    symmetric, so the same matrix also works as a left-multiplier).
    """
    m = np.zeros((n, n), dtype=np.float32)
    for d in range(-p, p + 1):
        m += np.float32(taps[d + p]) * np.eye(n, k=-d, dtype=np.float32)
    return m


def _pick_block_b(nc, h, w, itemsize):
    """Largest divisor of N*C whose (b*H, W) block is tile-aligned and modest."""
    sublane = 8 * max(1, 4 // itemsize)      # f32: 8, bf16: 16, int8/fp8: 32
    max_rows = 512                           # caps BH_blk (<= 1 MiB) & MXU waste
    max_bytes = 1 << 20                      # per full-size f32 map in VMEM
    legal = [b for b in range(1, nc + 1)
             if nc % b == 0 and (b * h) % sublane == 0]
    if not legal:
        return nc                            # full-array block is always legal
    good = [b for b in legal if b * h <= max_rows and b * h * w * 4 <= max_bytes]
    if good:
        return max(good)
    # TODO(synk): for very large frames (H*W too big for one VMEM block) add a
    # second grid axis that strip-tiles W with a 2p halo.
    return min(legal)


def _ssim_kernel(img1_ref, img2_ref, bw_ref, bh_ref, out_ref):
    """One grid step = BLOCK_B (n, c) slices stacked along rows: (BLOCK_B*H, W)."""
    # In-kernel cast: HBM->VMEM traffic stays in the input dtype.
    x1 = img1_ref[...].astype(jnp.float32)
    x2 = img2_ref[...].astype(jnp.float32)
    bw = bw_ref[...]        # (W, W)  width-conv taps (right multiply)
    bh = bh_ref[...]        # (R, R)  block-diagonal height-conv taps (left multiply)

    def conv_gauss(x):
        # Separable Gaussian conv as two MXU matmuls; zero padding is already
        # folded into the banded matrices.
        t = jnp.dot(x, bw, preferred_element_type=jnp.float32)
        return jnp.dot(bh, t, preferred_element_type=jnp.float32)

    mu1 = conv_gauss(x1)
    mu2 = conv_gauss(x2)
    mu1_sq = mu1 * mu1
    mu2_sq = mu2 * mu2
    mu1_mu2 = mu1 * mu2
    # Consume each E[.] conv immediately -> fewer live full-size maps / spills.
    sigma1_sq = conv_gauss(x1 * x1) - mu1_sq
    sigma2_sq = conv_gauss(x2 * x2) - mu2_sq
    sigma12 = conv_gauss(x1 * x2) - mu1_mu2

    num = (2.0 * mu1_mu2 + C1) * (2.0 * sigma12 + C2)
    den = (mu1_sq + mu2_sq + C1) * (sigma1_sq + sigma2_sq + C2)
    ssim_map = num / den

    # Per-block partial sum, broadcast into a tile-aligned lane-dense block
    # (unmasked full-vreg store); the wrapper reduces across blocks.
    s = jnp.sum(ssim_map)
    out_ref[...] = jnp.broadcast_to(s, out_ref.shape).astype(out_ref.dtype)


def ssim_pallas(img1, img2, window_size=WINDOW_SIZE, size_average=True):
    assert size_average, "only size_average=True (scalar mean) is implemented"
    # TODO(synk): size_average=False (per-image mean) needs per-image partials.
    assert img1.shape == img2.shape
    N, C, H, W = img1.shape
    NC = N * C
    p = window_size // 2
    taps = _gauss_taps(window_size, SIGMA)

    itemsize = jnp.dtype(img1.dtype).itemsize
    block_b = _pick_block_b(NC, H, W, itemsize)
    R = block_b * H
    G = NC // block_b

    # Banded tap matrices (built once on host).
    bw = _band_matrix(W, taps, p)                                    # (W, W)
    bh_blk = np.kron(np.eye(block_b, dtype=np.float32),
                     _band_matrix(H, taps, p)).astype(np.float32)    # (R, R)

    # Free contiguous reshape: no pad, no cast, no transpose in HBM.
    x1 = img1.reshape(NC * H, W)
    x2 = img2.reshape(NC * H, W)

    out = pl.pallas_call(
        _ssim_kernel,
        out_shape=jax.ShapeDtypeStruct((G, 8, 128), jnp.float32),
        grid_spec=pltpu.PrefetchScalarGridSpec(
            num_scalar_prefetch=0,
            grid=(G,),
            in_specs=[
                pl.BlockSpec((R, W), lambda i: (i, 0)),
                pl.BlockSpec((R, W), lambda i: (i, 0)),
                pl.BlockSpec((W, W), lambda i: (0, 0)),
                pl.BlockSpec((R, R), lambda i: (0, 0)),
            ],
            out_specs=pl.BlockSpec((1, 8, 128), lambda i: (i, 0, 0)),
        ),
        compiler_params=pltpu.CompilerParams(
            dimension_semantics=("parallel",),
            vmem_limit_bytes=48 * 1024 * 1024,
        ),
    )(x1, x2, jnp.asarray(bw), jnp.asarray(bh_blk))

    return out[:, 0, 0].sum() / jnp.float32(NC * H * W)


def _ssim_reference(img1, img2, window_size=WINDOW_SIZE):
    # Pure-JAX reference (depthwise conv via lax) for a sanity check.
    N, C, H, W = img1.shape
    p = window_size // 2
    g = jnp.asarray(_gauss_taps(window_size, SIGMA), dtype=jnp.float32)
    w2d = jnp.outer(g, g)  # [K, K]
    window = jnp.broadcast_to(w2d, (C, 1, window_size, window_size))

    def conv(x):
        return lax.conv_general_dilated(
            x, window, window_strides=(1, 1), padding=[(p, p), (p, p)],
            dimension_numbers=("NCHW", "OIHW", "NCHW"),
            feature_group_count=C, precision=lax.Precision.HIGHEST)

    mu1, mu2 = conv(img1), conv(img2)
    mu1_sq, mu2_sq, mu1_mu2 = mu1 * mu1, mu2 * mu2, mu1 * mu2
    sigma1_sq = conv(img1 * img1) - mu1_sq
    sigma2_sq = conv(img2 * img2) - mu2_sq
    sigma12 = conv(img1 * img2) - mu1_mu2
    ssim_map = ((2 * mu1_mu2 + C1) * (2 * sigma12 + C2)) / (
        (mu1_sq + mu2_sq + C1) * (sigma1_sq + sigma2_sq + C2))
    return ssim_map.mean()


if __name__ == "__main__":
    key = jax.random.PRNGKey(0)
    k1, k2 = jax.random.split(key)
    N, C, H, W = 2, 4, 16, 16
    img1 = jax.random.uniform(k1, (N, C, H, W), dtype=jnp.float32)
    img2 = jax.random.uniform(k2, (N, C, H, W), dtype=jnp.float32)

    out = jax.block_until_ready(ssim_pallas(img1, img2))
    ref = jax.block_until_ready(_ssim_reference(img1, img2))
    assert jnp.allclose(out, ref, rtol=2e-4, atol=2e-4), (out, ref)

    print("KERNEL_OK")
</pallas_src>

<mosaic_0001>
module attributes {stable_mosaic.version = 11 : i64} {
  func.func @_ssim_kernel(%arg0: i32, %arg1: memref<128x16xf32, #tpu.memory_space<vmem>>, %arg2: memref<128x16xf32, #tpu.memory_space<vmem>>, %arg3: memref<16x16xf32, #tpu.memory_space<vmem>>, %arg4: memref<128x128xf32, #tpu.memory_space<vmem>>, %arg5: memref<1x8x128xf32, #tpu.memory_space<vmem>>) attributes {dimension_semantics = [#tpu.dimension_semantics<parallel>], iteration_bounds = array<i64: 1>, scalar_prefetch = 0 : i64, scratch_operands = 0 : i64, tpu.core_type = #tpu.core_type<tc>, window_params = [{transform_indices = @transform_0, window_bounds = array<i64: 128, 16>}, {transform_indices = @transform_1, window_bounds = array<i64: 128, 16>}, {pipeline_mode = #tpu.pipeline_mode<synchronous>, transform_indices = @transform_2, window_bounds = array<i64: 16, 16>}, {pipeline_mode = #tpu.pipeline_mode<synchronous>, transform_indices = @transform_3, window_bounds = array<i64: 128, 128>}, {transform_indices = @transform_4, window_bounds = array<i64: 1, 8, 128>}]} {
    %c0 = arith.constant 0 : index
    %c0_0 = arith.constant 0 : index
    %0 = vector.load %arg1[%c0, %c0_0] : memref<128x16xf32, #tpu.memory_space<vmem>>, vector<128x16xf32>
    %c0_1 = arith.constant 0 : index
    %c0_2 = arith.constant 0 : index
    %1 = vector.load %arg2[%c0_1, %c0_2] : memref<128x16xf32, #tpu.memory_space<vmem>>, vector<128x16xf32>
    %c0_3 = arith.constant 0 : index
    %c0_4 = arith.constant 0 : index
    %2 = vector.load %arg3[%c0_3, %c0_4] : memref<16x16xf32, #tpu.memory_space<vmem>>, vector<16x16xf32>
    %c0_5 = arith.constant 0 : index
    %c0_6 = arith.constant 0 : index
    %3 = vector.load %arg4[%c0_5, %c0_6] : memref<128x128xf32, #tpu.memory_space<vmem>>, vector<128x128xf32>
    %cst = arith.constant dense<0.000000e+00> : vector<128x16xf32>
    %4 = tpu.matmul %0, %2, %cst {dimension_numbers = #tpu.dot_dimension_numbers<[1], [0], [0], [1], [0, 0, 1, 1], [], []>} : vector<128x16xf32>, vector<16x16xf32>, vector<128x16xf32> -> vector<128x16xf32>
    %cst_7 = arith.constant dense<0.000000e+00> : vector<128x16xf32>
    %5 = tpu.matmul %3, %4, %cst_7 {dimension_numbers = #tpu.dot_dimension_numbers<[1], [0], [0], [1], [0, 0, 1, 1], [], []>} : vector<128x128xf32>, vector<128x16xf32>, vector<128x16xf32> -> vector<128x16xf32>
    %cst_8 = arith.constant dense<0.000000e+00> : vector<128x16xf32>
    %6 = tpu.matmul %1, %2, %cst_8 {dimension_numbers = #tpu.dot_dimension_numbers<[1], [0], [0], [1], [0, 0, 1, 1], [], []>} : vector<128x16xf32>, vector<16x16xf32>, vector<128x16xf32> -> vector<128x16xf32>
    %cst_9 = arith.constant dense<0.000000e+00> : vector<128x16xf32>
    %7 = tpu.matmul %3, %6, %cst_9 {dimension_numbers = #tpu.dot_dimension_numbers<[1], [0], [0], [1], [0, 0, 1, 1], [], []>} : vector<128x128xf32>, vector<128x16xf32>, vector<128x16xf32> -> vector<128x16xf32>
    %8 = arith.mulf %5, %5 : vector<128x16xf32>
    %9 = arith.mulf %7, %7 : vector<128x16xf32>
    %10 = arith.mulf %5, %7 : vector<128x16xf32>
    %11 = arith.mulf %0, %0 : vector<128x16xf32>
    %cst_10 = arith.constant dense<0.000000e+00> : vector<128x16xf32>
    %12 = tpu.matmul %11, %2, %cst_10 {dimension_numbers = #tpu.dot_dimension_numbers<[1], [0], [0], [1], [0, 0, 1, 1], [], []>} : vector<128x16xf32>, vector<16x16xf32>, vector<128x16xf32> -> vector<128x16xf32>
    %cst_11 = arith.constant dense<0.000000e+00> : vector<128x16xf32>
    %13 = tpu.matmul %3, %12, %cst_11 {dimension_numbers = #tpu.dot_dimension_numbers<[1], [0], [0], [1], [0, 0, 1, 1], [], []>} : vector<128x128xf32>, vector<128x16xf32>, vector<128x16xf32> -> vector<128x16xf32>
    %14 = arith.subf %13, %8 : vector<128x16xf32>
    %15 = arith.mulf %1, %1 : vector<128x16xf32>
    %cst_12 = arith.constant dense<0.000000e+00> : vector<128x16xf32>
    %16 = tpu.matmul %15, %2, %cst_12 {dimension_numbers = #tpu.dot_dimension_numbers<[1], [0], [0], [1], [0, 0, 1, 1], [], []>} : vector<128x16xf32>, vector<16x16xf32>, vector<128x16xf32> -> vector<128x16xf32>
    %cst_13 = arith.constant dense<0.000000e+00> : vector<128x16xf32>
    %17 = tpu.matmul %3, %16, %cst_13 {dimension_numbers = #tpu.dot_dimension_numbers<[1], [0], [0], [1], [0, 0, 1, 1], [], []>} : vector<128x128xf32>, vector<128x16xf32>, vector<128x16xf32> -> vector<128x16xf32>
    %18 = arith.subf %17, %9 : vector<128x16xf32>
    %19 = arith.mulf %0, %1 : vector<128x16xf32>
    %cst_14 = arith.constant dense<0.000000e+00> : vector<128x16xf32>
    %20 = tpu.matmul %19, %2, %cst_14 {dimension_numbers = #tpu.dot_dimension_numbers<[1], [0], [0], [1], [0, 0, 1, 1], [], []>} : vector<128x16xf32>, vector<16x16xf32>, vector<128x16xf32> -> vector<128x16xf32>
    %cst_15 = arith.constant dense<0.000000e+00> : vector<128x16xf32>
    %21 = tpu.matmul %3, %20, %cst_15 {dimension_numbers = #tpu.dot_dimension_numbers<[1], [0], [0], [1], [0, 0, 1, 1], [], []>} : vector<128x128xf32>, vector<128x16xf32>, vector<128x16xf32> -> vector<128x16xf32>
    %22 = arith.subf %21, %10 : vector<128x16xf32>
    %cst_16 = arith.constant 2.000000e+00 : f32
    %23 = vector.broadcast %cst_16 : f32 to vector<128x16xf32>
    %24 = arith.mulf %23, %10 : vector<128x16xf32>
    %cst_17 = arith.constant 9.99999974E-5 : f32
    %25 = vector.broadcast %cst_17 : f32 to vector<128x16xf32>
    %26 = arith.addf %24, %25 : vector<128x16xf32>
    %cst_18 = arith.constant 2.000000e+00 : f32
    %27 = vector.broadcast %cst_18 : f32 to vector<128x16xf32>
    %28 = arith.mulf %27, %22 : vector<128x16xf32>
    %cst_19 = arith.constant 8.99999984E-4 : f32
    %29 = vector.broadcast %cst_19 : f32 to vector<128x16xf32>
    %30 = arith.addf %28, %29 : vector<128x16xf32>
    %31 = arith.mulf %26, %30 : vector<128x16xf32>
    %32 = arith.addf %8, %9 : vector<128x16xf32>
    %cst_20 = arith.constant 9.99999974E-5 : f32
    %33 = vector.broadcast %cst_20 : f32 to vector<128x16xf32>
    %34 = arith.addf %32, %33 : vector<128x16xf32>
    %35 = arith.addf %14, %18 : vector<128x16xf32>
    %cst_21 = arith.constant 8.99999984E-4 : f32
    %36 = vector.broadcast %cst_21 : f32 to vector<128x16xf32>
    %37 = arith.addf %35, %36 : vector<128x16xf32>
    %38 = arith.mulf %34, %37 : vector<128x16xf32>
    %39 = arith.divf %31, %38 : vector<128x16xf32>
    %40 = vector.shape_cast %39 : vector<128x16xf32> to vector<1x128x16xf32>
    %cst_22 = arith.constant dense<0.000000e+00> : vector<1xf32>
    %41 = vector.multi_reduction <add>, %40, %cst_22 [1, 2] : vector<1x128x16xf32> to vector<1xf32>
    %42 = vector.shape_cast %41 : vector<1xf32> to vector<1x1x1xf32>
    %43 = vector.extract %42[0, 0, 0] : f32 from vector<1x1x1xf32>
    %44 = vector.broadcast %43 : f32 to vector<1x8x128xf32>
    %c0_23 = arith.constant 0 : index
    %c0_24 = arith.constant 0 : index
    %c0_25 = arith.constant 0 : index
    %45 = vector.load %arg5[%c0_23, %c0_24, %c0_25] : memref<1x8x128xf32, #tpu.memory_space<vmem>>, vector<1x8x128xf32>
    tpu.vector_store %arg5[%c0_23, %c0_24, %c0_25], %44 {strides = array<i32>} : memref<1x8x128xf32, #tpu.memory_space<vmem>>, vector<1x8x128xf32>,
    return
  }
  func.func @transform_0(%arg0: i32) -> (i32, i32) {
    %c0_i32 = arith.constant 0 : i32
    %c0_i32_0 = arith.constant 0 : i32
    return %arg0, %c0_i32 : i32, i32
  }
  func.func @transform_1(%arg0: i32) -> (i32, i32) {
    %c0_i32 = arith.constant 0 : i32
    %c0_i32_0 = arith.constant 0 : i32
    return %arg0, %c0_i32 : i32, i32
  }
  func.func @transform_2(%arg0: i32) -> (i32, i32) {
    %c0_i32 = arith.constant 0 : i32
    %c0_i32_0 = arith.constant 0 : i32
    %c0_i32_1 = arith.constant 0 : i32
    return %c0_i32, %c0_i32_0 : i32, i32
  }
  func.func @transform_3(%arg0: i32) -> (i32, i32) {
    %c0_i32 = arith.constant 0 : i32
    %c0_i32_0 = arith.constant 0 : i32
    %c0_i32_1 = arith.constant 0 : i32
    return %c0_i32, %c0_i32_0 : i32, i32
  }
  func.func @transform_4(%arg0: i32) -> (i32, i32, i32) {
    %c0_i32 = arith.constant 0 : i32
    %c0_i32_0 = arith.constant 0 : i32
    %c0_i32_1 = arith.constant 0 : i32
    return %arg0, %c0_i32, %c0_i32_0 : i32, i32, i32
  }
}

</mosaic_0001>

<llo_original>
// kernel: tpu_custom_call.1
$region0: #{tpu_custom_call.1}
  #allocation0 [shape = 'u32[]', space=smem, size = 0x4, offset = 0x4, fixed_abs, tag = 'smem constant byte address 0x4 - core index']
  #allocation1 [shape = 'u32[144,128]{1,0:T(1,128)}', space=vmem, size = 0x12000, scoped, tag = 'internal scratch']
  %s0 = inlined_call_operand.vmem [shape: f32[128,16], index: 0, kind: input, shape index: {}]
  %s1 = inlined_call_operand.vmem [shape: f32[128,16], index: 1, kind: input, shape index: {}]
  %s2 = inlined_call_operand.vmem [shape: f32[16,16], index: 2, kind: input, shape index: {}]
  %s3 = inlined_call_operand.vmem [shape: f32[128,128], index: 3, kind: input, shape index: {}]
  %s4 = inlined_call_operand.hbm [shape: f32[1,8,128], index: 4, kind: output, shape index: {}]
  %s5 = sld [smem:[#allocation0]]
  $region26: #{tpu_custom_call.1} parent=0
    _
  %s7 = ssub.s32 1, %s5
  %s8 = scalar_select 0, %s7, %s5
  $region1: #{tpu_custom_call.1} parent=0
    #allocation2 [shape = 'u8[4096]{0}', space=vmem, size = 0x1000, scoped, tag = 'output window, operand 0, single buffered']
    #allocation3 [shape = 's32[1]{0}', space=sflag, size = 0x4, scoped, tag = 'scoped memory for tpu_custom_call.1']
    %9 = vsyncpa [#allocation3], 0
    // Predicated region
    $region2: #{tpu_custom_call.1} parent=1 // pred_check
      _
    $region3: #{tpu_custom_call.1} parent=1 // pred_check_branch
      %11 = sbr.rel (0) target = $region5
    $region4: #{tpu_custom_call.1} parent=1 // pred_region
      _
    $region5: #{tpu_custom_call.1} parent=1 // pred_fallthru
      _
    // Predicated region
    $region6: #{tpu_custom_call.1} parent=1 // pred_check
      _
    $region7: #{tpu_custom_call.1} parent=1 // pred_check_branch
      %13 = sbr.rel (0) target = $region9
    $region8: #{tpu_custom_call.1} parent=1 // pred_region
      _
    $region9: #{tpu_custom_call.1} parent=1 // pred_fallthru
      _
    // Predicated region
    $region10: #{tpu_custom_call.1} parent=1 // pred_check
      _
    $region11: #{tpu_custom_call.1} parent=1 // pred_check_branch
      %15 = sbr.rel (0) target = $region13
    $region12: #{tpu_custom_call.1} parent=1 // pred_region
      _
    $region13: #{tpu_custom_call.1} parent=1 // pred_fallthru
      _
    // Predicated region
    $region14: #{tpu_custom_call.1} parent=1 // pred_check
      _
    $region15: #{tpu_custom_call.1} parent=1 // pred_check_branch
      %17 = sbr.rel (0) target = $region17
    $region16: #{tpu_custom_call.1} parent=1 // pred_region
      _
    $region17: #{tpu_custom_call.1} parent=1 // pred_fallthru
      _
    %v18 = vld [vmem:[%s0] sm:$0xff]
    %v19 = vld [vmem:[%s0 + $0x8] sm:$0xff]
    %v20 = vld [vmem:[%s0 + $0x10] sm:$0xff]
    %v21 = vld [vmem:[%s0 + $0x18] sm:$0xff]
    %v22 = vld [vmem:[%s0 + $0x20] sm:$0xff]
    %v23 = vld [vmem:[%s0 + $0x28] sm:$0xff]
    %v24 = vld [vmem:[%s0 + $0x30] sm:$0xff]
    %v25 = vld [vmem:[%s0 + $0x38] sm:$0xff]
    %v26 = vld [vmem:[%s0 + $0x40] sm:$0xff]
    %v27 = vld [vmem:[%s0 + $0x48] sm:$0xff]
    %v28 = vld [vmem:[%s0 + $0x50] sm:$0xff]
    %v29 = vld [vmem:[%s0 + $0x58] sm:$0xff]
    %v30 = vld [vmem:[%s0 + $0x60] sm:$0xff]
    %v31 = vld [vmem:[%s0 + $0x68] sm:$0xff]
    %v32 = vld [vmem:[%s0 + $0x70] sm:$0xff]
    %v33 = vld [vmem:[%s0 + $0x78] sm:$0xff]
    %v34 = vld [vmem:[%s1] sm:$0xff]
    %v35 = vld [vmem:[%s1 + $0x8] sm:$0xff]
    %v36 = vld [vmem:[%s1 + $0x10] sm:$0xff]
    %v37 = vld [vmem:[%s1 + $0x18] sm:$0xff]
    %v38 = vld [vmem:[%s1 + $0x20] sm:$0xff]
    %v39 = vld [vmem:[%s1 + $0x28] sm:$0xff]
    %v40 = vld [vmem:[%s1 + $0x30] sm:$0xff]
    %v41 = vld [vmem:[%s1 + $0x38] sm:$0xff]
    %v42 = vld [vmem:[%s1 + $0x40] sm:$0xff]
    %v43 = vld [vmem:[%s1 + $0x48] sm:$0xff]
    %v44 = vld [vmem:[%s1 + $0x50] sm:$0xff]
    %v45 = vld [vmem:[%s1 + $0x58] sm:$0xff]
    %v46 = vld [vmem:[%s1 + $0x60] sm:$0xff]
    %v47 = vld [vmem:[%s1 + $0x68] sm:$0xff]
    %v48 = vld [vmem:[%s1 + $0x70] sm:$0xff]
    %v49 = vld [vmem:[%s1 + $0x78] sm:$0xff]
    %v50 = vld [vmem:[%s2] sm:$0xff]
    %v51 = vld [vmem:[%s2 + $0x8] sm:$0xff]
    %v52 = vld [vmem:[%s3] sm:$0xff]
    %v53 = vld [vmem:[%s3 + $0x8] sm:$0xff]
    %v54 = vld [vmem:[%s3 + $0x10] sm:$0xff]
    %v55 = vld [vmem:[%s3 + $0x18] sm:$0xff]
    %v56 = vld [vmem:[%s3 + $0x20] sm:$0xff]
    %v57 = vld [vmem:[%s3 + $0x28] sm:$0xff]
    %v58 = vld [vmem:[%s3 + $0x30] sm:$0xff]
    %v59 = vld [vmem:[%s3 + $0x38] sm:$0xff]
    %v60 = vld [vmem:[%s3 + $0x40] sm:$0xff]
    %v61 = vld [vmem:[%s3 + $0x48] sm:$0xff]
    %v62 = vld [vmem:[%s3 + $0x50] sm:$0xff]
    %v63 = vld [vmem:[%s3 + $0x58] sm:$0xff]
    %v64 = vld [vmem:[%s3 + $0x60] sm:$0xff]
    %v65 = vld [vmem:[%s3 + $0x68] sm:$0xff]
    %v66 = vld [vmem:[%s3 + $0x70] sm:$0xff]
    %v67 = vld [vmem:[%s3 + $0x78] sm:$0xff]
    %vm68 = vcmask 130048
    %v70 = vsel %vm68, %v18, 0
    %v73 = vsel %vm68, %v19, 0
    %v76 = vsel %vm68, %v20, 0
    %v79 = vsel %vm68, %v21, 0
    %v82 = vsel %vm68, %v22, 0
    %v85 = vsel %vm68, %v23, 0
    %v88 = vsel %vm68, %v24, 0
    %v91 = vsel %vm68, %v25, 0
    %v94 = vsel %vm68, %v26, 0
    %v97 = vsel %vm68, %v27, 0
    %v100 = vsel %vm68, %v28, 0
    %v103 = vsel %vm68, %v29, 0
    %v106 = vsel %vm68, %v30, 0
    %v109 = vsel %vm68, %v31, 0
    %v112 = vsel %vm68, %v32, 0
    %v115 = vsel %vm68, %v33, 0
    %117 = vmatprep.subr.mxu0 0.0
    %118 = vmatpush1.msra.mxu0 0.0
    %119 = vmatprep.subr.mxu0 0.0
    %120 = vmatpush1.msra.mxu0 0.0
    %121 = vmatprep.subr.mxu0 0.0
    %122 = vmatpush1.msra.mxu0 0.0
    %123 = vmatprep.subr.mxu0 0.0
    %124 = vmatpush1.msra.mxu0 0.0
    %125 = vmatprep.subr.mxu0 0.0
    %126 = vmatpush1.msra.mxu0 0.0
    %127 = vmatprep.subr.mxu0 0.0
    %128 = vmatpush1.msra.mxu0 0.0
    %129 = vmatprep.subr.mxu0 0.0
    %130 = vmatpush1.msra.mxu0 0.0
    %131 = vmatprep.subr.mxu0 0.0
    %132 = vmatpush1.msra.mxu0 0.0
    %133 = vmatprep.subr.mxu0 0.0
    %134 = vmatpush1.msra.mxu0 0.0
    %135 = vmatprep.subr.mxu0 0.0
    %136 = vmatpush1.msra.mxu0 0.0
    %137 = vmatprep.subr.mxu0 0.0
    %138 = vmatpush1.msra.mxu0 0.0
    %139 = vmatprep.subr.mxu0 0.0
    %140 = vmatpush1.msra.mxu0 0.0
    %141 = vmatprep.subr.mxu0 0.0
    %142 = vmatpush1.msra.mxu0 0.0
    %143 = vmatprep.subr.mxu0 0.0
    %144 = vmatpush1.msra.mxu0 0.0
    %145 = vmatprep.subr.mxu0 0.0
    %146 = vmatpush1.msra.mxu0 %v51
    %147 = vmatprep.subr.mxu0 0.0
    %148 = vmatpush1.msra.mxu0 %v50
    %149 = vmatprep.subr.mxu0 0.0
    %150 = vmatpush2.msra.mxu0 0.0
    %151 = vmatprep.subr.mxu0 0.0
    %152 = vmatpush2.msra.mxu0 0.0
    %153 = vmatprep.subr.mxu0 0.0
    %154 = vmatpush2.msra.mxu0 0.0
    %155 = vmatprep.subr.mxu0 0.0
    %156 = vmatpush2.msra.mxu0 0.0
    %157 = vmatprep.subr.mxu0 0.0
    %158 = vmatpush2.msra.mxu0 0.0
    %159 = vmatprep.subr.mxu0 0.0
    %160 = vmatpush2.msra.mxu0 0.0
    %161 = vmatprep.subr.mxu0 0.0
    %162 = vmatpush2.msra.mxu0 0.0
    %163 = vmatprep.subr.mxu0 0.0
    %164 = vmatpush2.msra.mxu0 0.0
    %165 = vmatprep.subr.mxu0 0.0
    %166 = vmatpush2.msra.mxu0 0.0
    %167 = vmatprep.subr.mxu0 0.0
    %168 = vmatpush2.msra.mxu0 0.0
    %169 = vmatprep.subr.mxu0 0.0
    %170 = vmatpush2.msra.mxu0 0.0
    %171 = vmatprep.subr.mxu0 0.0
    %172 = vmatpush2.msra.mxu0 0.0
    %173 = vmatprep.subr.mxu0 0.0
    %174 = vmatpush2.msra.mxu0 0.0
    %175 = vmatprep.subr.mxu0 0.0
    %176 = vmatpush2.msra.mxu0 0.0
    %177 = vmatprep.subr.mxu0 0.0
    %178 = vmatpush2.msra.mxu0 0.0
    %179 = vmatprep.subr.mxu0 0.0
    %180 = vmatpush2.msra.mxu0 0.0
    %181 = vmatprep.mubr.f32.mxu0 0.0
    %182 = vmatmul.mubr.f32.gmra.mxu0 %v70
    %v183 = vpop.f32.mrf.mxu0
    %v184 = vadd.f32 0.0, %v183
    %v185 = vpop.f32.mrf.mxu0
    %186 = vmatprep.mubr.f32.mxu0 0.0
    %187 = vmatmul.mubr.f32.gmra.mxu0 %v73
    %v188 = vpop.f32.mrf.mxu0
    %v189 = vadd.f32 0.0, %v188
    %v190 = vpop.f32.mrf.mxu0
    %191 = vmatprep.mubr.f32.mxu0 0.0
    %192 = vmatmul.mubr.f32.gmra.mxu0 %v76
    %v193 = vpop.f32.mrf.mxu0
    %v194 = vadd.f32 0.0, %v193
    %v195 = vpop.f32.mrf.mxu0
    %196 = vmatprep.mubr.f32.mxu0 0.0
    %197 = vmatmul.mubr.f32.gmra.mxu0 %v79
    %v198 = vpop.f32.mrf.mxu0
    %v199 = vadd.f32 0.0, %v198
    %v200 = vpop.f32.mrf.mxu0
    %201 = vmatprep.mubr.f32.mxu0 0.0
    %202 = vmatmul.mubr.f32.gmra.mxu0 %v82
    %v203 = vpop.f32.mrf.mxu0
    %v204 = vadd.f32 0.0, %v203
    %v205 = vpop.f32.mrf.mxu0
    %206 = vmatprep.mubr.f32.mxu0 0.0
    %207 = vmatmul.mubr.f32.gmra.mxu0 %v85
    %v208 = vpop.f32.mrf.mxu0
    %v209 = vadd.f32 0.0, %v208
    %v210 = vpop.f32.mrf.mxu0
    %211 = vmatprep.mubr.f32.mxu0 0.0
    %212 = vmatmul.mubr.f32.gmra.mxu0 %v88
    %v213 = vpop.f32.mrf.mxu0
    %v214 = vadd.f32 0.0, %v213
    %v215 = vpop.f32.mrf.mxu0
    %216 = vmatprep.mubr.f32.mxu0 0.0
    %217 = vmatmul.mubr.f32.gmra.mxu0 %v91
    %v218 = vpop.f32.mrf.mxu0
    %v219 = vadd.f32 0.0, %v218
    %v220 = vpop.f32.mrf.mxu0
    %221 = vmatprep.mubr.f32.mxu0 0.0
    %222 = vmatmul.mubr.f32.gmra.mxu0 %v94
    %v223 = vpop.f32.mrf.mxu0
    %v224 = vadd.f32 0.0, %v223
    %v225 = vpop.f32.mrf.mxu0
    %226 = vmatprep.mubr.f32.mxu0 0.0
    %227 = vmatmul.mubr.f32.gmra.mxu0 %v97
    %v228 = vpop.f32.mrf.mxu0
    %v229 = vadd.f32 0.0, %v228
    %v230 = vpop.f32.mrf.mxu0
    %231 = vmatprep.mubr.f32.mxu0 0.0
    %232 = vmatmul.mubr.f32.gmra.mxu0 %v100
    %v233 = vpop.f32.mrf.mxu0
    %v234 = vadd.f32 0.0, %v233
    %v235 = vpop.f32.mrf.mxu0
    %236 = vmatprep.mubr.f32.mxu0 0.0
    %237 = vmatmul.mubr.f32.gmra.mxu0 %v103
    %v238 = vpop.f32.mrf.mxu0
    %v239 = vadd.f32 0.0, %v238
    %v240 = vpop.f32.mrf.mxu0
    %241 = vmatprep.mubr.f32.mxu0 0.0
    %242 = vmatmul.mubr.f32.gmra.mxu0 %v106
    %v243 = vpop.f32.mrf.mxu0
    %v244 = vadd.f32 0.0, %v243
    %v245 = vpop.f32.mrf.mxu0
    %246 = vmatprep.mubr.f32.mxu0 0.0
    %247 = vmatmul.mubr.f32.gmra.mxu0 %v109
    %v248 = vpop.f32.mrf.mxu0
    %v249 = vadd.f32 0.0, %v248
    %v250 = vpop.f32.mrf.mxu0
    %251 = vmatprep.mubr.f32.mxu0 0.0
    %252 = vmatmul.mubr.f32.gmra.mxu0 %v112
    %v253 = vpop.f32.mrf.mxu0
    %v254 = vadd.f32 0.0, %v253
    %v255 = vpop.f32.mrf.mxu0
    %256 = vmatprep.mubr.f32.mxu0 0.0
    %257 = vmatmul.mubr.f32.gmra.mxu0 %v115
    %v258 = vpop.f32.mrf.mxu0
    %v259 = vadd.f32 0.0, %v258
    %v260 = vpop.f32.mrf.mxu0
    %261 = vdwg.mxu0
    %262 = vmatprep.subr.mxu0 0.0
    %263 = vmatpush1.msra.mxu0 %v259
    %264 = vmatprep.subr.mxu0 0.0
    %265 = vmatpush1.msra.mxu0 %v254
    %266 = vmatprep.subr.mxu0 0.0
    %267 = vmatpush1.msra.mxu0 %v249
    %268 = vmatprep.subr.mxu0 0.0
    %269 = vmatpush1.msra.mxu0 %v244
    %270 = vmatprep.subr.mxu0 0.0
    %271 = vmatpush1.msra.mxu0 %v239
    %272 = vmatprep.subr.mxu0 0.0
    %273 = vmatpush1.msra.mxu0 %v234
    %274 = vmatprep.subr.mxu0 0.0
    %275 = vmatpush1.msra.mxu0 %v229
    %276 = vmatprep.subr.mxu0 0.0
    %277 = vmatpush1.msra.mxu0 %v224
    %278 = vmatprep.subr.mxu0 0.0
    %279 = vmatpush1.msra.mxu0 %v219
    %280 = vmatprep.subr.mxu0 0.0
    %281 = vmatpush1.msra.mxu0 %v214
    %282 = vmatprep.subr.mxu0 0.0
    %283 = vmatpush1.msra.mxu0 %v209
    %284 = vmatprep.subr.mxu0 0.0
    %285 = vmatpush1.msra.mxu0 %v204
    %286 = vmatprep.subr.mxu0 0.0
    %287 = vmatpush1.msra.mxu0 %v199
    %288 = vmatprep.subr.mxu0 0.0
    %289 = vmatpush1.msra.mxu0 %v194
    %290 = vmatprep.subr.mxu0 0.0
    %291 = vmatpush1.msra.mxu0 %v189
    %292 = vmatprep.subr.mxu0 0.0
    %293 = vmatpush1.msra.mxu0 %v184
    %294 = vmatprep.subr.mxu0 0.0
    %295 = vmatpush2.msra.mxu0 0.0
    %296 = vmatprep.subr.mxu0 0.0
    %297 = vmatpush2.msra.mxu0 0.0
    %298 = vmatprep.subr.mxu0 0.0
    %299 = vmatpush2.msra.mxu0 0.0
    %300 = vmatprep.subr.mxu0 0.0
    %301 = vmatpush2.msra.mxu0 0.0
    %302 = vmatprep.subr.mxu0 0.0
    %303 = vmatpush2.msra.mxu0 0.0
    %304 = vmatprep.subr.mxu0 0.0
    %305 = vmatpush2.msra.mxu0 0.0
    %306 = vmatprep.subr.mxu0 0.0
    %307 = vmatpush2.msra.mxu0 0.0
    %308 = vmatprep.subr.mxu0 0.0
    %309 = vmatpush2.msra.mxu0 0.0
    %310 = vmatprep.subr.mxu0 0.0
    %311 = vmatpush2.msra.mxu0 0.0
    %312 = vmatprep.subr.mxu0 0.0
    %313 = vmatpush2.msra.mxu0 0.0
    %314 = vmatprep.subr.mxu0 0.0
    %315 = vmatpush2.msra.mxu0 0.0
    %316 = vmatprep.subr.mxu0 0.0
    %317 = vmatpush2.msra.mxu0 0.0
    %318 = vmatprep.subr.mxu0 0.0
    %319 = vmatpush2.msra.mxu0 0.0
    %320 = vmatprep.subr.mxu0 0.0
    %321 = vmatpush2.msra.mxu0 0.0
    %322 = vmatprep.subr.mxu0 0.0
    %323 = vmatpush2.msra.mxu0 0.0
    %324 = vmatprep.subr.mxu0 0.0
    %325 = vmatpush2.msra.mxu0 0.0
    %326 = vmatprep.mubr.f32.mxu0 0.0
    %327 = vmatmul.mubr.f32.gmra.mxu0 %v52
    %v328 = vpop.f32.mrf.mxu0
    %v329 = vadd.f32 0.0, %v328
    %v330 = vpop.f32.mrf.mxu0
    %331 = vmatprep.mubr.f32.mxu0 0.0
    %332 = vmatmul.mubr.f32.gmra.mxu0 %v53
    %v333 = vpop.f32.mrf.mxu0
    %v334 = vadd.f32 0.0, %v333
    %v335 = vpop.f32.mrf.mxu0
    %336 = vmatprep.mubr.f32.mxu0 0.0
    %337 = vmatmul.mubr.f32.gmra.mxu0 %v54
    %v338 = vpop.f32.mrf.mxu0
    %v339 = vadd.f32 0.0, %v338
    %v340 = vpop.f32.mrf.mxu0
    %341 = vmatprep.mubr.f32.mxu0 0.0
    %342 = vmatmul.mubr.f32.gmra.mxu0 %v55
    %v343 = vpop.f32.mrf.mxu0
    %v344 = vadd.f32 0.0, %v343
    %v345 = vpop.f32.mrf.mxu0
    %346 = vmatprep.mubr.f32.mxu0 0.0
    %347 = vmatmul.mubr.f32.gmra.mxu0 %v56
    %v348 = vpop.f32.mrf.mxu0
    %v349 = vadd.f32 0.0, %v348
    %v350 = vpop.f32.mrf.mxu0
    %351 = vmatprep.mubr.f32.mxu0 0.0
    %352 = vmatmul.mubr.f32.gmra.mxu0 %v57
    %v353 = vpop.f32.mrf.mxu0
    %v354 = vadd.f32 0.0, %v353
    %v355 = vpop.f32.mrf.mxu0
    %356 = vmatprep.mubr.f32.mxu0 0.0
    %357 = vmatmul.mubr.f32.gmra.mxu0 %v58
    %v358 = vpop.f32.mrf.mxu0
    %v359 = vadd.f32 0.0, %v358
    %v360 = vpop.f32.mrf.mxu0
    %361 = vmatprep.mubr.f32.mxu0 0.0
    %362 = vmatmul.mubr.f32.gmra.mxu0 %v59
    %v363 = vpop.f32.mrf.mxu0
    %v364 = vadd.f32 0.0, %v363
    %v365 = vpop.f32.mrf.mxu0
    %366 = vmatprep.mubr.f32.mxu0 0.0
    %367 = vmatmul.mubr.f32.gmra.mxu0 %v60
    %v368 = vpop.f32.mrf.mxu0
    %v369 = vadd.f32 0.0, %v368
    %v370 = vpop.f32.mrf.mxu0
    %371 = vmatprep.mubr.f32.mxu0 0.0
    %372 = vmatmul.mubr.f32.gmra.mxu0 %v61
    %v373 = vpop.f32.mrf.mxu0
    %v374 = vadd.f32 0.0, %v373
    %v375 = vpop.f32.mrf.mxu0
    %376 = vmatprep.mubr.f32.mxu0 0.0
    %377 = vmatmul.mubr.f32.gmra.mxu0 %v62
    %v378 = vpop.f32.mrf.mxu0
    %v379 = vadd.f32 0.0, %v378
    %v380 = vpop.f32.mrf.mxu0
    %381 = vmatprep.mubr.f32.mxu0 0.0
    %382 = vmatmul.mubr.f32.gmra.mxu0 %v63
    %v383 = vpop.f32.mrf.mxu0
    %v384 = vadd.f32 0.0, %v383
    %v385 = vpop.f32.mrf.mxu0
    %386 = vmatprep.mubr.f32.mxu0 0.0
    %387 = vmatmul.mubr.f32.gmra.mxu0 %v64
    %v388 = vpop.f32.mrf.mxu0
    %v389 = vadd.f32 0.0, %v388
    %v390 = vpop.f32.mrf.mxu0
    %391 = vmatprep.mubr.f32.mxu0 0.0
    %392 = vmatmul.mubr.f32.gmra.mxu0 %v65
    %v393 = vpop.f32.mrf.mxu0
    %v394 = vadd.f32 0.0, %v393
    %v395 = vpop.f32.mrf.mxu0
    %396 = vmatprep.mubr.f32.mxu0 0.0
    %397 = vmatmul.mubr.f32.gmra.mxu0 %v66
    %v398 = vpop.f32.mrf.mxu0
    %v399 = vadd.f32 0.0, %v398
    %v400 = vpop.f32.mrf.mxu0
    %401 = vmatprep.mubr.f32.mxu0 0.0
    %402 = vmatmul.mubr.f32.gmra.mxu0 %v67
    %v403 = vpop.f32.mrf.mxu0
    %v404 = vadd.f32 0.0, %v403
    %v405 = vpop.f32.mrf.mxu0
    %406 = vdwg.mxu0
    %v408 = vsel %vm68, %v34, 0
    %v411 = vsel %vm68, %v35, 0
    %v414 = vsel %vm68, %v36, 0
    %v417 = vsel %vm68, %v37, 0
    %v420 = vsel %vm68, %v38, 0
    %v423 = vsel %vm68, %v39, 0
    %v426 = vsel %vm68, %v40, 0
    %v429 = vsel %vm68, %v41, 0
    %v432 = vsel %vm68, %v42, 0
    %v435 = vsel %vm68, %v43, 0
    %v438 = vsel %vm68, %v44, 0
    %v441 = vsel %vm68, %v45, 0
    %v444 = vsel %vm68, %v46, 0
    %v447 = vsel %vm68, %v47, 0
    %v450 = vsel %vm68, %v48, 0
    %v453 = vsel %vm68, %v49, 0
    %455 = vmatprep.subr.mxu0 0.0
    %456 = vmatpush1.msra.mxu0 0.0
    %457 = vmatprep.subr.mxu0 0.0
    %458 = vmatpush1.msra.mxu0 0.0
    %459 = vmatprep.subr.mxu0 0.0
    %460 = vmatpush1.msra.mxu0 0.0
    %461 = vmatprep.subr.mxu0 0.0
    %462 = vmatpush1.msra.mxu0 0.0
    %463 = vmatprep.subr.mxu0 0.0
    %464 = vmatpush1.msra.mxu0 0.0
    %465 = vmatprep.subr.mxu0 0.0
    %466 = vmatpush1.msra.mxu0 0.0
    %467 = vmatprep.subr.mxu0 0.0
    %468 = vmatpush1.msra.mxu0 0.0
    %469 = vmatprep.subr.mxu0 0.0
    %470 = vmatpush1.msra.mxu0 0.0
    %471 = vmatprep.subr.mxu0 0.0
    %472 = vmatpush1.msra.mxu0 0.0
    %473 = vmatprep.subr.mxu0 0.0
    %474 = vmatpush1.msra.mxu0 0.0
    %475 = vmatprep.subr.mxu0 0.0
    %476 = vmatpush1.msra.mxu0 0.0
    %477 = vmatprep.subr.mxu0 0.0
    %478 = vmatpush1.msra.mxu0 0.0
    %479 = vmatprep.subr.mxu0 0.0
    %480 = vmatpush1.msra.mxu0 0.0
    %481 = vmatprep.subr.mxu0 0.0
    %482 = vmatpush1.msra.mxu0 0.0
    %483 = vmatprep.subr.mxu0 0.0
    %484 = vmatpush1.msra.mxu0 %v51
    %485 = vmatprep.subr.mxu0 0.0
    %486 = vmatpush1.msra.mxu0 %v50
    %487 = vmatprep.subr.mxu0 0.0
    %488 = vmatpush2.msra.mxu0 0.0
    %489 = vmatprep.subr.mxu0 0.0
    %490 = vmatpush2.msra.mxu0 0.0
    %491 = vmatprep.subr.mxu0 0.0
    %492 = vmatpush2.msra.mxu0 0.0
    %493 = vmatprep.subr.mxu0 0.0
    %494 = vmatpush2.msra.mxu0 0.0
    %495 = vmatprep.subr.mxu0 0.0
    %496 = vmatpush2.msra.mxu0 0.0
    %497 = vmatprep.subr.mxu0 0.0
    %498 = vmatpush2.msra.mxu0 0.0
    %499 = vmatprep.subr.mxu0 0.0
    %500 = vmatpush2.msra.mxu0 0.0
    %501 = vmatprep.subr.mxu0 0.0
    %502 = vmatpush2.msra.mxu0 0.0
    %503 = vmatprep.subr.mxu0 0.0
    %504 = vmatpush2.msra.mxu0 0.0
    %505 = vmatprep.subr.mxu0 0.0
    %506 = vmatpush2.msra.mxu0 0.0
    %507 = vmatprep.subr.mxu0 0.0
    %508 = vmatpush2.msra.mxu0 0.0
    %509 = vmatprep.subr.mxu0 0.0
    %510 = vmatpush2.msra.mxu0 0.0
    %511 = vmatprep.subr.mxu0 0.0
    %512 = vmatpush2.msra.mxu0 0.0
    %513 = vmatprep.subr.mxu0 0.0
    %514 = vmatpush2.msra.mxu0 0.0
    %515 = vmatprep.subr.mxu0 0.0
    %516 = vmatpush2.msra.mxu0 0.0
    %517 = vmatprep.subr.mxu0 0.0
    %518 = vmatpush2.msra.mxu0 0.0
    %519 = vmatprep.mubr.f32.mxu0 0.0
    %520 = vmatmul.mubr.f32.gmra.mxu0 %v408
    %v521 = vpop.f32.mrf.mxu0
    %v522 = vadd.f32 0.0, %v521
    %v523 = vpop.f32.mrf.mxu0
    %524 = vmatprep.mubr.f32.mxu0 0.0
    %525 = vmatmul.mubr.f32.gmra.mxu0 %v411
    %v526 = vpop.f32.mrf.mxu0
    %v527 = vadd.f32 0.0, %v526
    %v528 = vpop.f32.mrf.mxu0
    %529 = vmatprep.mubr.f32.mxu0 0.0
    %530 = vmatmul.mubr.f32.gmra.mxu0 %v414
    %v531 = vpop.f32.mrf.mxu0
    %v532 = vadd.f32 0.0, %v531
    %v533 = vpop.f32.mrf.mxu0
    %534 = vmatprep.mubr.f32.mxu0 0.0
    %535 = vmatmul.mubr.f32.gmra.mxu0 %v417
    %v536 = vpop.f32.mrf.mxu0
    %v537 = vadd.f32 0.0, %v536
    %v538 = vpop.f32.mrf.mxu0
    %539 = vmatprep.mubr.f32.mxu0 0.0
    %540 = vmatmul.mubr.f32.gmra.mxu0 %v420
    %v541 = vpop.f32.mrf.mxu0
    %v542 = vadd.f32 0.0, %v541
    %v543 = vpop.f32.mrf.mxu0
    %544 = vmatprep.mubr.f32.mxu0 0.0
    %545 = vmatmul.mubr.f32.gmra.mxu0 %v423
    %v546 = vpop.f32.mrf.mxu0
    %v547 = vadd.f32 0.0, %v546
    %v548 = vpop.f32.mrf.mxu0
    %549 = vmatprep.mubr.f32.mxu0 0.0
    %550 = vmatmul.mubr.f32.gmra.mxu0 %v426
    %v551 = vpop.f32.mrf.mxu0
    %v552 = vadd.f32 0.0, %v551
    %v553 = vpop.f32.mrf.mxu0
    %554 = vmatprep.mubr.f32.mxu0 0.0
    %555 = vmatmul.mubr.f32.gmra.mxu0 %v429
    %v556 = vpop.f32.mrf.mxu0
    %v557 = vadd.f32 0.0, %v556
    %v558 = vpop.f32.mrf.mxu0
    %559 = vmatprep.mubr.f32.mxu0 0.0
    %560 = vmatmul.mubr.f32.gmra.mxu0 %v432
    %v561 = vpop.f32.mrf.mxu0
    %v562 = vadd.f32 0.0, %v561
    %v563 = vpop.f32.mrf.mxu0
    %564 = vmatprep.mubr.f32.mxu0 0.0
    %565 = vmatmul.mubr.f32.gmra.mxu0 %v435
    %v566 = vpop.f32.mrf.mxu0
    %v567 = vadd.f32 0.0, %v566
    %v568 = vpop.f32.mrf.mxu0
    %569 = vmatprep.mubr.f32.mxu0 0.0
    %570 = vmatmul.mubr.f32.gmra.mxu0 %v438
    %v571 = vpop.f32.mrf.mxu0
    %v572 = vadd.f32 0.0, %v571
    %v573 = vpop.f32.mrf.mxu0
    %574 = vmatprep.mubr.f32.mxu0 0.0
    %575 = vmatmul.mubr.f32.gmra.mxu0 %v441
    %v576 = vpop.f32.mrf.mxu0
    %v577 = vadd.f32 0.0, %v576
    %v578 = vpop.f32.mrf.mxu0
    %579 = vmatprep.mubr.f32.mxu0 0.0
    %580 = vmatmul.mubr.f32.gmra.mxu0 %v444
    %v581 = vpop.f32.mrf.mxu0
    %v582 = vadd.f32 0.0, %v581
    %v583 = vpop.f32.mrf.mxu0
    %584 = vmatprep.mubr.f32.mxu0 0.0
    %585 = vmatmul.mubr.f32.gmra.mxu0 %v447
    %v586 = vpop.f32.mrf.mxu0
    %v587 = vadd.f32 0.0, %v586
    %v588 = vpop.f32.mrf.mxu0
    %589 = vmatprep.mubr.f32.mxu0 0.0
    %590 = vmatmul.mubr.f32.gmra.mxu0 %v450
    %v591 = vpop.f32.mrf.mxu0
    %v592 = vadd.f32 0.0, %v591
    %v593 = vpop.f32.mrf.mxu0
    %594 = vmatprep.mubr.f32.mxu0 0.0
    %595 = vmatmul.mubr.f32.gmra.mxu0 %v453
    %v596 = vpop.f32.mrf.mxu0
    %v597 = vadd.f32 0.0, %v596
    %v598 = vpop.f32.mrf.mxu0
    %599 = vdwg.mxu0
    %600 = vmatprep.subr.mxu0 0.0
    %601 = vmatpush1.msra.mxu0 %v597
    %602 = vmatprep.subr.mxu0 0.0
    %603 = vmatpush1.msra.mxu0 %v592
    %604 = vmatprep.subr.mxu0 0.0
    %605 = vmatpush1.msra.mxu0 %v587
    %606 = vmatprep.subr.mxu0 0.0
    %607 = vmatpush1.msra.mxu0 %v582
    %608 = vmatprep.subr.mxu0 0.0
    %609 = vmatpush1.msra.mxu0 %v577
    %610 = vmatprep.subr.mxu0 0.0
    %611 = vmatpush1.msra.mxu0 %v572
    %612 = vmatprep.subr.mxu0 0.0
    %613 = vmatpush1.msra.mxu0 %v567
    %614 = vmatprep.subr.mxu0 0.0
    %615 = vmatpush1.msra.mxu0 %v562
    %616 = vmatprep.subr.mxu0 0.0
    %617 = vmatpush1.msra.mxu0 %v557
    %618 = vmatprep.subr.mxu0 0.0
    %619 = vmatpush1.msra.mxu0 %v552
    %620 = vmatprep.subr.mxu0 0.0
    %621 = vmatpush1.msra.mxu0 %v547
    %622 = vmatprep.subr.mxu0 0.0
    %623 = vmatpush1.msra.mxu0 %v542
    %624 = vmatprep.subr.mxu0 0.0
    %625 = vmatpush1.msra.mxu0 %v537
    %626 = vmatprep.subr.mxu0 0.0
    %627 = vmatpush1.msra.mxu0 %v532
    %628 = vmatprep.subr.mxu0 0.0
    %629 = vmatpush1.msra.mxu0 %v527
    %630 = vmatprep.subr.mxu0 0.0
    %631 = vmatpush1.msra.mxu0 %v522
    %632 = vmatprep.subr.mxu0 0.0
    %633 = vmatpush2.msra.mxu0 0.0
    %634 = vmatprep.subr.mxu0 0.0
    %635 = vmatpush2.msra.mxu0 0.0
    %636 = vmatprep.subr.mxu0 0.0
    %637 = vmatpush2.msra.mxu0 0.0
    %638 = vmatprep.subr.mxu0 0.0
    %639 = vmatpush2.msra.mxu0 0.0
    %640 = vmatprep.subr.mxu0 0.0
    %641 = vmatpush2.msra.mxu0 0.0
    %642 = vmatprep.subr.mxu0 0.0
    %643 = vmatpush2.msra.mxu0 0.0
    %644 = vmatprep.subr.mxu0 0.0
    %645 = vmatpush2.msra.mxu0 0.0
    %646 = vmatprep.subr.mxu0 0.0
    %647 = vmatpush2.msra.mxu0 0.0
    %648 = vmatprep.subr.mxu0 0.0
    %649 = vmatpush2.msra.mxu0 0.0
    %650 = vmatprep.subr.mxu0 0.0
    %651 = vmatpush2.msra.mxu0 0.0
    %652 = vmatprep.subr.mxu0 0.0
    %653 = vmatpush2.msra.mxu0 0.0
    %654 = vmatprep.subr.mxu0 0.0
    %655 = vmatpush2.msra.mxu0 0.0
    %656 = vmatprep.subr.mxu0 0.0
    %657 = vmatpush2.msra.mxu0 0.0
    %658 = vmatprep.subr.mxu0 0.0
    %659 = vmatpush2.msra.mxu0 0.0
    %660 = vmatprep.subr.mxu0 0.0
    %661 = vmatpush2.msra.mxu0 0.0
    %662 = vmatprep.subr.mxu0 0.0
    %663 = vmatpush2.msra.mxu0 0.0
    %664 = vmatprep.mubr.f32.mxu0 0.0
    %665 = vmatmul.mubr.f32.gmra.mxu0 %v52
    %v666 = vpop.f32.mrf.mxu0
    %v667 = vadd.f32 0.0, %v666
    %v668 = vpop.f32.mrf.mxu0
    %669 = vmatprep.mubr.f32.mxu0 0.0
    %670 = vmatmul.mubr.f32.gmra.mxu0 %v53
    %v671 = vpop.f32.mrf.mxu0
    %v672 = vadd.f32 0.0, %v671
    %v673 = vpop.f32.mrf.mxu0
    %674 = vmatprep.mubr.f32.mxu0 0.0
    %675 = vmatmul.mubr.f32.gmra.mxu0 %v54
    %v676 = vpop.f32.mrf.mxu0
    %v677 = vadd.f32 0.0, %v676
    %v678 = vpop.f32.mrf.mxu0
    %679 = vmatprep.mubr.f32.mxu0 0.0
    %680 = vmatmul.mubr.f32.gmra.mxu0 %v55
    %v681 = vpop.f32.mrf.mxu0
    %v682 = vadd.f32 0.0, %v681
    %v683 = vpop.f32.mrf.mxu0
    %684 = vmatprep.mubr.f32.mxu0 0.0
    %685 = vmatmul.mubr.f32.gmra.mxu0 %v56
    %v686 = vpop.f32.mrf.mxu0
    %v687 = vadd.f32 0.0, %v686
    %v688 = vpop.f32.mrf.mxu0
    %689 = vmatprep.mubr.f32.mxu0 0.0
    %690 = vmatmul.mubr.f32.gmra.mxu0 %v57
    %v691 = vpop.f32.mrf.mxu0
    %v692 = vadd.f32 0.0, %v691
    %v693 = vpop.f32.mrf.mxu0
    %694 = vmatprep.mubr.f32.mxu0 0.0
    %695 = vmatmul.mubr.f32.gmra.mxu0 %v58
    %v696 = vpop.f32.mrf.mxu0
    %v697 = vadd.f32 0.0, %v696
    %v698 = vpop.f32.mrf.mxu0
    %699 = vmatprep.mubr.f32.mxu0 0.0
    %700 = vmatmul.mubr.f32.gmra.mxu0 %v59
    %v701 = vpop.f32.mrf.mxu0
    %v702 = vadd.f32 0.0, %v701
    %v703 = vpop.f32.mrf.mxu0
    %704 = vmatprep.mubr.f32.mxu0 0.0
    %705 = vmatmul.mubr.f32.gmra.mxu0 %v60
    %v706 = vpop.f32.mrf.mxu0
    %v707 = vadd.f32 0.0, %v706
    %v708 = vpop.f32.mrf.mxu0
    %709 = vmatprep.mubr.f32.mxu0 0.0
    %710 = vmatmul.mubr.f32.gmra.mxu0 %v61
    %v711 = vpop.f32.mrf.mxu0
    %v712 = vadd.f32 0.0, %v711
    %v713 = vpop.f32.mrf.mxu0
    %714 = vmatprep.mubr.f32.mxu0 0.0
    %715 = vmatmul.mubr.f32.gmra.mxu0 %v62
    %v716 = vpop.f32.mrf.mxu0
    %v717 = vadd.f32 0.0, %v716
    %v718 = vpop.f32.mrf.mxu0
    %719 = vmatprep.mubr.f32.mxu0 0.0
    %720 = vmatmul.mubr.f32.gmra.mxu0 %v63
    %v721 = vpop.f32.mrf.mxu0
    %v722 = vadd.f32 0.0, %v721
    %v723 = vpop.f32.mrf.mxu0
    %724 = vmatprep.mubr.f32.mxu0 0.0
    %725 = vmatmul.mubr.f32.gmra.mxu0 %v64
    %v726 = vpop.f32.mrf.mxu0
    %v727 = vadd.f32 0.0, %v726
    %v728 = vpop.f32.mrf.mxu0
    %729 = vmatprep.mubr.f32.mxu0 0.0
    %730 = vmatmul.mubr.f32.gmra.mxu0 %v65
    %v731 = vpop.f32.mrf.mxu0
    %v732 = vadd.f32 0.0, %v731
    %v733 = vpop.f32.mrf.mxu0
    %734 = vmatprep.mubr.f32.mxu0 0.0
    %735 = vmatmul.mubr.f32.gmra.mxu0 %v66
    %v736 = vpop.f32.mrf.mxu0
    %v737 = vadd.f32 0.0, %v736
    %v738 = vpop.f32.mrf.mxu0
    %739 = vmatprep.mubr.f32.mxu0 0.0
    %740 = vmatmul.mubr.f32.gmra.mxu0 %v67
    %v741 = vpop.f32.mrf.mxu0
    %v742 = vadd.f32 0.0, %v741
    %v743 = vpop.f32.mrf.mxu0
    %744 = vdwg.mxu0
    %v745 = vmul.f32 %v329, %v329
    %v746 = vmul.f32 %v334, %v334
    %v747 = vmul.f32 %v339, %v339
    %v748 = vmul.f32 %v344, %v344
    %v749 = vmul.f32 %v349, %v349
    %v750 = vmul.f32 %v354, %v354
    %v751 = vmul.f32 %v359, %v359
    %v752 = vmul.f32 %v364, %v364
    %v753 = vmul.f32 %v369, %v369
    %v754 = vmul.f32 %v374, %v374
    %v755 = vmul.f32 %v379, %v379
    %v756 = vmul.f32 %v384, %v384
    %v757 = vmul.f32 %v389, %v389
    %v758 = vmul.f32 %v394, %v394
    %v759 = vmul.f32 %v399, %v399
    %v760 = vmul.f32 %v404, %v404
    %v761 = vmul.f32 %v667, %v667
    %v762 = vmul.f32 %v672, %v672
    %v763 = vmul.f32 %v677, %v677
    %v764 = vmul.f32 %v682, %v682
    %v765 = vmul.f32 %v687, %v687
    %v766 = vmul.f32 %v692, %v692
    %v767 = vmul.f32 %v697, %v697
    %v768 = vmul.f32 %v702, %v702
    %v769 = vmul.f32 %v707, %v707
    %v770 = vmul.f32 %v712, %v712
    %v771 = vmul.f32 %v717, %v717
    %v772 = vmul.f32 %v722, %v722
    %v773 = vmul.f32 %v727, %v727
    %v774 = vmul.f32 %v732, %v732
    %v775 = vmul.f32 %v737, %v737
    %v776 = vmul.f32 %v742, %v742
    %v777 = vmul.f32 %v329, %v667
    %v778 = vmul.f32 %v334, %v672
    %v779 = vmul.f32 %v339, %v677
    %v780 = vmul.f32 %v344, %v682
    %v781 = vmul.f32 %v349, %v687
    %v782 = vmul.f32 %v354, %v692
    %v783 = vmul.f32 %v359, %v697
    %v784 = vmul.f32 %v364, %v702
    %v785 = vmul.f32 %v369, %v707
    %v786 = vmul.f32 %v374, %v712
    %v787 = vmul.f32 %v379, %v717
    %v788 = vmul.f32 %v384, %v722
    %v789 = vmul.f32 %v389, %v727
    %v790 = vmul.f32 %v394, %v732
    %v791 = vmul.f32 %v399, %v737
    %v792 = vmul.f32 %v404, %v742
    %v793 = vmul.f32 %v18, %v18
    %v794 = vmul.f32 %v19, %v19
    %v795 = vmul.f32 %v20, %v20
    %v796 = vmul.f32 %v21, %v21
    %v797 = vmul.f32 %v22, %v22
    %v798 = vmul.f32 %v23, %v23
    %v799 = vmul.f32 %v24, %v24
    %v800 = vmul.f32 %v25, %v25
    %v801 = vmul.f32 %v26, %v26
    %v802 = vmul.f32 %v27, %v27
    %v803 = vmul.f32 %v28, %v28
    %v804 = vmul.f32 %v29, %v29
    %v805 = vmul.f32 %v30, %v30
    %v806 = vmul.f32 %v31, %v31
    %v807 = vmul.f32 %v32, %v32
    %v808 = vmul.f32 %v33, %v33
    %v810 = vsel %vm68, %v793, 0
    %v813 = vsel %vm68, %v794, 0
    %v816 = vsel %vm68, %v795, 0
    %v819 = vsel %vm68, %v796, 0
    %v822 = vsel %vm68, %v797, 0
    %v825 = vsel %vm68, %v798, 0
    %v828 = vsel %vm68, %v799, 0
    %v831 = vsel %vm68, %v800, 0
    %v834 = vsel %vm68, %v801, 0
    %v837 = vsel %vm68, %v802, 0
    %v840 = vsel %vm68, %v803, 0
    %v843 = vsel %vm68, %v804, 0
    %v846 = vsel %vm68, %v805, 0
    %v849 = vsel %vm68, %v806, 0
    %v852 = vsel %vm68, %v807, 0
    %v855 = vsel %vm68, %v808, 0
    %857 = vmatprep.subr.mxu0 0.0
    %858 = vmatpush1.msra.mxu0 0.0
    %859 = vmatprep.subr.mxu0 0.0
    %860 = vmatpush1.msra.mxu0 0.0
    %861 = vmatprep.subr.mxu0 0.0
    %862 = vmatpush1.msra.mxu0 0.0
    %863 = vmatprep.subr.mxu0 0.0
    %864 = vmatpush1.msra.mxu0 0.0
    %865 = vmatprep.subr.mxu0 0.0
    %866 = vmatpush1.msra.mxu0 0.0
    %867 = vmatprep.subr.mxu0 0.0
    %868 = vmatpush1.msra.mxu0 0.0
    %869 = vmatprep.subr.mxu0 0.0
    %870 = vmatpush1.msra.mxu0 0.0
    %871 = vmatprep.subr.mxu0 0.0
    %872 = vmatpush1.msra.mxu0 0.0
    %873 = vmatprep.subr.mxu0 0.0
    %874 = vmatpush1.msra.mxu0 0.0
    %875 = vmatprep.subr.mxu0 0.0
    %876 = vmatpush1.msra.mxu0 0.0
    %877 = vmatprep.subr.mxu0 0.0
    %878 = vmatpush1.msra.mxu0 0.0
    %879 = vmatprep.subr.mxu0 0.0
    %880 = vmatpush1.msra.mxu0 0.0
    %881 = vmatprep.subr.mxu0 0.0
    %882 = vmatpush1.msra.mxu0 0.0
    %883 = vmatprep.subr.mxu0 0.0
    %884 = vmatpush1.msra.mxu0 0.0
    %885 = vmatprep.subr.mxu0 0.0
    %886 = vmatpush1.msra.mxu0 %v51
    %887 = vmatprep.subr.mxu0 0.0
    %888 = vmatpush1.msra.mxu0 %v50
    %889 = vmatprep.subr.mxu0 0.0
    %890 = vmatpush2.msra.mxu0 0.0
    %891 = vmatprep.subr.mxu0 0.0
    %892 = vmatpush2.msra.mxu0 0.0
    %893 = vmatprep.subr.mxu0 0.0
    %894 = vmatpush2.msra.mxu0 0.0
    %895 = vmatprep.subr.mxu0 0.0
    %896 = vmatpush2.msra.mxu0 0.0
    %897 = vmatprep.subr.mxu0 0.0
    %898 = vmatpush2.msra.mxu0 0.0
    %899 = vmatprep.subr.mxu0 0.0
    %900 = vmatpush2.msra.mxu0 0.0
    %901 = vmatprep.subr.mxu0 0.0
    %902 = vmatpush2.msra.mxu0 0.0
    %903 = vmatprep.subr.mxu0 0.0
    %904 = vmatpush2.msra.mxu0 0.0
    %905 = vmatprep.subr.mxu0 0.0
    %906 = vmatpush2.msra.mxu0 0.0
    %907 = vmatprep.subr.mxu0 0.0
    %908 = vmatpush2.msra.mxu0 0.0
    %909 = vmatprep.subr.mxu0 0.0
    %910 = vmatpush2.msra.mxu0 0.0
    %911 = vmatprep.subr.mxu0 0.0
    %912 = vmatpush2.msra.mxu0 0.0
    %913 = vmatprep.subr.mxu0 0.0
    %914 = vmatpush2.msra.mxu0 0.0
    %915 = vmatprep.subr.mxu0 0.0
    %916 = vmatpush2.msra.mxu0 0.0
    %917 = vmatprep.subr.mxu0 0.0
    %918 = vmatpush2.msra.mxu0 0.0
    %919 = vmatprep.subr.mxu0 0.0
    %920 = vmatpush2.msra.mxu0 0.0
    %921 = vmatprep.mubr.f32.mxu0 0.0
    %922 = vmatmul.mubr.f32.gmra.mxu0 %v810
    %v923 = vpop.f32.mrf.mxu0
    %v924 = vadd.f32 0.0, %v923
    %v925 = vpop.f32.mrf.mxu0
    %926 = vmatprep.mubr.f32.mxu0 0.0
    %927 = vmatmul.mubr.f32.gmra.mxu0 %v813
    %v928 = vpop.f32.mrf.mxu0
    %v929 = vadd.f32 0.0, %v928
    %v930 = vpop.f32.mrf.mxu0
    %931 = vmatprep.mubr.f32.mxu0 0.0
    %932 = vmatmul.mubr.f32.gmra.mxu0 %v816
    %v933 = vpop.f32.mrf.mxu0
    %v934 = vadd.f32 0.0, %v933
    %v935 = vpop.f32.mrf.mxu0
    %936 = vmatprep.mubr.f32.mxu0 0.0
    %937 = vmatmul.mubr.f32.gmra.mxu0 %v819
    %v938 = vpop.f32.mrf.mxu0
    %v939 = vadd.f32 0.0, %v938
    %v940 = vpop.f32.mrf.mxu0
    %941 = vmatprep.mubr.f32.mxu0 0.0
    %942 = vmatmul.mubr.f32.gmra.mxu0 %v822
    %v943 = vpop.f32.mrf.mxu0
    %v944 = vadd.f32 0.0, %v943
    %v945 = vpop.f32.mrf.mxu0
    %946 = vmatprep.mubr.f32.mxu0 0.0
    %947 = vmatmul.mubr.f32.gmra.mxu0 %v825
    %v948 = vpop.f32.mrf.mxu0
    %v949 = vadd.f32 0.0, %v948
    %v950 = vpop.f32.mrf.mxu0
    %951 = vmatprep.mubr.f32.mxu0 0.0
    %952 = vmatmul.mubr.f32.gmra.mxu0 %v828
    %v953 = vpop.f32.mrf.mxu0
    %v954 = vadd.f32 0.0, %v953
    %v955 = vpop.f32.mrf.mxu0
    %956 = vmatprep.mubr.f32.mxu0 0.0
    %957 = vmatmul.mubr.f32.gmra.mxu0 %v831
    %v958 = vpop.f32.mrf.mxu0
    %v959 = vadd.f32 0.0, %v958
    %v960 = vpop.f32.mrf.mxu0
    %961 = vmatprep.mubr.f32.mxu0 0.0
    %962 = vmatmul.mubr.f32.gmra.mxu0 %v834
    %v963 = vpop.f32.mrf.mxu0
    %v964 = vadd.f32 0.0, %v963
    %v965 = vpop.f32.mrf.mxu0
    %966 = vmatprep.mubr.f32.mxu0 0.0
    %967 = vmatmul.mubr.f32.gmra.mxu0 %v837
    %v968 = vpop.f32.mrf.mxu0
    %v969 = vadd.f32 0.0, %v968
    %v970 = vpop.f32.mrf.mxu0
    %971 = vmatprep.mubr.f32.mxu0 0.0
    %972 = vmatmul.mubr.f32.gmra.mxu0 %v840
    %v973 = vpop.f32.mrf.mxu0
    %v974 = vadd.f32 0.0, %v973
    %v975 = vpop.f32.mrf.mxu0
    %976 = vmatprep.mubr.f32.mxu0 0.0
    %977 = vmatmul.mubr.f32.gmra.mxu0 %v843
    %v978 = vpop.f32.mrf.mxu0
    %v979 = vadd.f32 0.0, %v978
    %v980 = vpop.f32.mrf.mxu0
    %981 = vmatprep.mubr.f32.mxu0 0.0
    %982 = vmatmul.mubr.f32.gmra.mxu0 %v846
    %v983 = vpop.f32.mrf.mxu0
    %v984 = vadd.f32 0.0, %v983
    %v985 = vpop.f32.mrf.mxu0
    %986 = vmatprep.mubr.f32.mxu0 0.0
    %987 = vmatmul.mubr.f32.gmra.mxu0 %v849
    %v988 = vpop.f32.mrf.mxu0
    %v989 = vadd.f32 0.0, %v988
    %v990 = vpop.f32.mrf.mxu0
    %991 = vmatprep.mubr.f32.mxu0 0.0
    %992 = vmatmul.mubr.f32.gmra.mxu0 %v852
    %v993 = vpop.f32.mrf.mxu0
    %v994 = vadd.f32 0.0, %v993
    %v995 = vpop.f32.mrf.mxu0
    %996 = vmatprep.mubr.f32.mxu0 0.0
    %997 = vmatmul.mubr.f32.gmra.mxu0 %v855
    %v998 = vpop.f32.mrf.mxu0
    %v999 = vadd.f32 0.0, %v998
    %v1000 = vpop.f32.mrf.mxu0
    %1001 = vdwg.mxu0
    %1002 = vmatprep.subr.mxu0 0.0
    %1003 = vmatpush1.msra.mxu0 %v999
    %1004 = vmatprep.subr.mxu0 0.0
    %1005 = vmatpush1.msra.mxu0 %v994
    %1006 = vmatprep.subr.mxu0 0.0
    %1007 = vmatpush1.msra.mxu0 %v989
    %1008 = vmatprep.subr.mxu0 0.0
    %1009 = vmatpush1.msra.mxu0 %v984
    %1010 = vmatprep.subr.mxu0 0.0
    %1011 = vmatpush1.msra.mxu0 %v979
    %1012 = vmatprep.subr.mxu0 0.0
    %1013 = vmatpush1.msra.mxu0 %v974
    %1014 = vmatprep.subr.mxu0 0.0
    %1015 = vmatpush1.msra.mxu0 %v969
    %1016 = vmatprep.subr.mxu0 0.0
    %1017 = vmatpush1.msra.mxu0 %v964
    %1018 = vmatprep.subr.mxu0 0.0
    %1019 = vmatpush1.msra.mxu0 %v959
    %1020 = vmatprep.subr.mxu0 0.0
    %1021 = vmatpush1.msra.mxu0 %v954
    %1022 = vmatprep.subr.mxu0 0.0
    %1023 = vmatpush1.msra.mxu0 %v949
    %1024 = vmatprep.subr.mxu0 0.0
    %1025 = vmatpush1.msra.mxu0 %v944
    %1026 = vmatprep.subr.mxu0 0.0
    %1027 = vmatpush1.msra.mxu0 %v939
    %1028 = vmatprep.subr.mxu0 0.0
    %1029 = vmatpush1.msra.mxu0 %v934
    %1030 = vmatprep.subr.mxu0 0.0
    %1031 = vmatpush1.msra.mxu0 %v929
    %1032 = vmatprep.subr.mxu0 0.0
    %1033 = vmatpush1.msra.mxu0 %v924
    %1034 = vmatprep.subr.mxu0 0.0
    %1035 = vmatpush2.msra.mxu0 0.0
    %1036 = vmatprep.subr.mxu0 0.0
    %1037 = vmatpush2.msra.mxu0 0.0
    %1038 = vmatprep.subr.mxu0 0.0
    %1039 = vmatpush2.msra.mxu0 0.0
    %1040 = vmatprep.subr.mxu0 0.0
    %1041 = vmatpush2.msra.mxu0 0.0
    %1042 = vmatprep.subr.mxu0 0.0
    %1043 = vmatpush2.msra.mxu0 0.0
    %1044 = vmatprep.subr.mxu0 0.0
    %1045 = vmatpush2.msra.mxu0 0.0
    %1046 = vmatprep.subr.mxu0 0.0
    %1047 = vmatpush2.msra.mxu0 0.0
    %1048 = vmatprep.subr.mxu0 0.0
    %1049 = vmatpush2.msra.mxu0 0.0
    %1050 = vmatprep.subr.mxu0 0.0
    %1051 = vmatpush2.msra.mxu0 0.0
    %1052 = vmatprep.subr.mxu0 0.0
    %1053 = vmatpush2.msra.mxu0 0.0
    %1054 = vmatprep.subr.mxu0 0.0
    %1055 = vmatpush2.msra.mxu0 0.0
    %1056 = vmatprep.subr.mxu0 0.0
    %1057 = vmatpush2.msra.mxu0 0.0
    %1058 = vmatprep.subr.mxu0 0.0
    %1059 = vmatpush2.msra.mxu0 0.0
    %1060 = vmatprep.subr.mxu0 0.0
    %1061 = vmatpush2.msra.mxu0 0.0
    %1062 = vmatprep.subr.mxu0 0.0
    %1063 = vmatpush2.msra.mxu0 0.0
    %1064 = vmatprep.subr.mxu0 0.0
    %1065 = vmatpush2.msra.mxu0 0.0
    %1066 = vmatprep.mubr.f32.mxu0 0.0
    %1067 = vmatmul.mubr.f32.gmra.mxu0 %v52
    %v1068 = vpop.f32.mrf.mxu0
    %v1069 = vadd.f32 0.0, %v1068
    %v1070 = vpop.f32.mrf.mxu0
    %1071 = vmatprep.mubr.f32.mxu0 0.0
    %1072 = vmatmul.mubr.f32.gmra.mxu0 %v53
    %v1073 = vpop.f32.mrf.mxu0
    %v1074 = vadd.f32 0.0, %v1073
    %v1075 = vpop.f32.mrf.mxu0
    %1076 = vmatprep.mubr.f32.mxu0 0.0
    %1077 = vmatmul.mubr.f32.gmra.mxu0 %v54
    %v1078 = vpop.f32.mrf.mxu0
    %v1079 = vadd.f32 0.0, %v1078
    %v1080 = vpop.f32.mrf.mxu0
    %1081 = vmatprep.mubr.f32.mxu0 0.0
    %1082 = vmatmul.mubr.f32.gmra.mxu0 %v55
    %v1083 = vpop.f32.mrf.mxu0
    %v1084 = vadd.f32 0.0, %v1083
    %v1085 = vpop.f32.mrf.mxu0
    %1086 = vmatprep.mubr.f32.mxu0 0.0
    %1087 = vmatmul.mubr.f32.gmra.mxu0 %v56
    %v1088 = vpop.f32.mrf.mxu0
    %v1089 = vadd.f32 0.0, %v1088
    %v1090 = vpop.f32.mrf.mxu0
    %1091 = vmatprep.mubr.f32.mxu0 0.0
    %1092 = vmatmul.mubr.f32.gmra.mxu0 %v57
    %v1093 = vpop.f32.mrf.mxu0
    %v1094 = vadd.f32 0.0, %v1093
    %v1095 = vpop.f32.mrf.mxu0
    %1096 = vmatprep.mubr.f32.mxu0 0.0
    %1097 = vmatmul.mubr.f32.gmra.mxu0 %v58
    %v1098 = vpop.f32.mrf.mxu0
    %v1099 = vadd.f32 0.0, %v1098
    %v1100 = vpop.f32.mrf.mxu0
    %1101 = vmatprep.mubr.f32.mxu0 0.0
    %1102 = vmatmul.mubr.f32.gmra.mxu0 %v59
    %v1103 = vpop.f32.mrf.mxu0
    %v1104 = vadd.f32 0.0, %v1103
    %v1105 = vpop.f32.mrf.mxu0
    %1106 = vmatprep.mubr.f32.mxu0 0.0
    %1107 = vmatmul.mubr.f32.gmra.mxu0 %v60
    %v1108 = vpop.f32.mrf.mxu0
    %v1109 = vadd.f32 0.0, %v1108
    %v1110 = vpop.f32.mrf.mxu0
    %1111 = vmatprep.mubr.f32.mxu0 0.0
    %1112 = vmatmul.mubr.f32.gmra.mxu0 %v61
    %v1113 = vpop.f32.mrf.mxu0
    %v1114 = vadd.f32 0.0, %v1113
    %v1115 = vpop.f32.mrf.mxu0
    %1116 = vmatprep.mubr.f32.mxu0 0.0
    %1117 = vmatmul.mubr.f32.gmra.mxu0 %v62
    %v1118 = vpop.f32.mrf.mxu0
    %v1119 = vadd.f32 0.0, %v1118
    %v1120 = vpop.f32.mrf.mxu0
    %1121 = vmatprep.mubr.f32.mxu0 0.0
    %1122 = vmatmul.mubr.f32.gmra.mxu0 %v63
    %v1123 = vpop.f32.mrf.mxu0
    %v1124 = vadd.f32 0.0, %v1123
    %v1125 = vpop.f32.mrf.mxu0
    %1126 = vmatprep.mubr.f32.mxu0 0.0
    %1127 = vmatmul.mubr.f32.gmra.mxu0 %v64
    %v1128 = vpop.f32.mrf.mxu0
    %v1129 = vadd.f32 0.0, %v1128
    %v1130 = vpop.f32.mrf.mxu0
    %1131 = vmatprep.mubr.f32.mxu0 0.0
    %1132 = vmatmul.mubr.f32.gmra.mxu0 %v65
    %v1133 = vpop.f32.mrf.mxu0
    %v1134 = vadd.f32 0.0, %v1133
    %v1135 = vpop.f32.mrf.mxu0
    %1136 = vmatprep.mubr.f32.mxu0 0.0
    %1137 = vmatmul.mubr.f32.gmra.mxu0 %v66
    %v1138 = vpop.f32.mrf.mxu0
    %v1139 = vadd.f32 0.0, %v1138
    %v1140 = vpop.f32.mrf.mxu0
    %1141 = vmatprep.mubr.f32.mxu0 0.0
    %1142 = vmatmul.mubr.f32.gmra.mxu0 %v67
    %v1143 = vpop.f32.mrf.mxu0
    %v1144 = vadd.f32 0.0, %v1143
    %v1145 = vpop.f32.mrf.mxu0
    %1146 = vdwg.mxu0
    %v1147 = vsub.f32 %v1069, %v745
    %v1148 = vsub.f32 %v1074, %v746
    %v1149 = vsub.f32 %v1079, %v747
    %v1150 = vsub.f32 %v1084, %v748
    %v1151 = vsub.f32 %v1089, %v749
    %v1152 = vsub.f32 %v1094, %v750
    %v1153 = vsub.f32 %v1099, %v751
    %v1154 = vsub.f32 %v1104, %v752
    %v1155 = vsub.f32 %v1109, %v753
    %v1156 = vsub.f32 %v1114, %v754
    %v1157 = vsub.f32 %v1119, %v755
    %v1158 = vsub.f32 %v1124, %v756
    %v1159 = vsub.f32 %v1129, %v757
    %v1160 = vsub.f32 %v1134, %v758
    %v1161 = vsub.f32 %v1139, %v759
    %v1162 = vsub.f32 %v1144, %v760
    %v1163 = vmul.f32 %v34, %v34
    %v1164 = vmul.f32 %v35, %v35
    %v1165 = vmul.f32 %v36, %v36
    %v1166 = vmul.f32 %v37, %v37
    %v1167 = vmul.f32 %v38, %v38
    %v1168 = vmul.f32 %v39, %v39
    %v1169 = vmul.f32 %v40, %v40
    %v1170 = vmul.f32 %v41, %v41
    %v1171 = vmul.f32 %v42, %v42
    %v1172 = vmul.f32 %v43, %v43
    %v1173 = vmul.f32 %v44, %v44
    %v1174 = vmul.f32 %v45, %v45
    %v1175 = vmul.f32 %v46, %v46
    %v1176 = vmul.f32 %v47, %v47
    %v1177 = vmul.f32 %v48, %v48
    %v1178 = vmul.f32 %v49, %v49
    %v1180 = vsel %vm68, %v1163, 0
    %v1183 = vsel %vm68, %v1164, 0
    %v1186 = vsel %vm68, %v1165, 0
    %v1189 = vsel %vm68, %v1166, 0
    %v1192 = vsel %vm68, %v1167, 0
    %v1195 = vsel %vm68, %v1168, 0
    %v1198 = vsel %vm68, %v1169, 0
    %v1201 = vsel %vm68, %v1170, 0
    %v1204 = vsel %vm68, %v1171, 0
    %v1207 = vsel %vm68, %v1172, 0
    %v1210 = vsel %vm68, %v1173, 0
    %v1213 = vsel %vm68, %v1174, 0
    %v1216 = vsel %vm68, %v1175, 0
    %v1219 = vsel %vm68, %v1176, 0
    %v1222 = vsel %vm68, %v1177, 0
    %v1225 = vsel %vm68, %v1178, 0
    %1227 = vmatprep.subr.mxu0 0.0
    %1228 = vmatpush1.msra.mxu0 0.0
    %1229 = vmatprep.subr.mxu0 0.0
    %1230 = vmatpush1.msra.mxu0 0.0
    %1231 = vmatprep.subr.mxu0 0.0
    %1232 = vmatpush1.msra.mxu0 0.0
    %1233 = vmatprep.subr.mxu0 0.0
    %1234 = vmatpush1.msra.mxu0 0.0
    %1235 = vmatprep.subr.mxu0 0.0
    %1236 = vmatpush1.msra.mxu0 0.0
    %1237 = vmatprep.subr.mxu0 0.0
    %1238 = vmatpush1.msra.mxu0 0.0
    %1239 = vmatprep.subr.mxu0 0.0
    %1240 = vmatpush1.msra.mxu0 0.0
    %1241 = vmatprep.subr.mxu0 0.0
    %1242 = vmatpush1.msra.mxu0 0.0
    %1243 = vmatprep.subr.mxu0 0.0
    %1244 = vmatpush1.msra.mxu0 0.0
    %1245 = vmatprep.subr.mxu0 0.0
    %1246 = vmatpush1.msra.mxu0 0.0
    %1247 = vmatprep.subr.mxu0 0.0
    %1248 = vmatpush1.msra.mxu0 0.0
    %1249 = vmatprep.subr.mxu0 0.0
    %1250 = vmatpush1.msra.mxu0 0.0
    %1251 = vmatprep.subr.mxu0 0.0
    %1252 = vmatpush1.msra.mxu0 0.0
    %1253 = vmatprep.subr.mxu0 0.0
    %1254 = vmatpush1.msra.mxu0 0.0
    %1255 = vmatprep.subr.mxu0 0.0
    %1256 = vmatpush1.msra.mxu0 %v51
    %1257 = vmatprep.subr.mxu0 0.0
    %1258 = vmatpush1.msra.mxu0 %v50
    %1259 = vmatprep.subr.mxu0 0.0
    %1260 = vmatpush2.msra.mxu0 0.0
    %1261 = vmatprep.subr.mxu0 0.0
    %1262 = vmatpush2.msra.mxu0 0.0
    %1263 = vmatprep.subr.mxu0 0.0
    %1264 = vmatpush2.msra.mxu0 0.0
    %1265 = vmatprep.subr.mxu0 0.0
    %1266 = vmatpush2.msra.mxu0 0.0
    %1267 = vmatprep.subr.mxu0 0.0
    %1268 = vmatpush2.msra.mxu0 0.0
    %1269 = vmatprep.subr.mxu0 0.0
    %1270 = vmatpush2.msra.mxu0 0.0
    %1271 = vmatprep.subr.mxu0 0.0
    %1272 = vmatpush2.msra.mxu0 0.0
    %1273 = vmatprep.subr.mxu0 0.0
    %1274 = vmatpush2.msra.mxu0 0.0
    %1275 = vmatprep.subr.mxu0 0.0
    %1276 = vmatpush2.msra.mxu0 0.0
    %1277 = vmatprep.subr.mxu0 0.0
    %1278 = vmatpush2.msra.mxu0 0.0
    %1279 = vmatprep.subr.mxu0 0.0
    %1280 = vmatpush2.msra.mxu0 0.0
    %1281 = vmatprep.subr.mxu0 0.0
    %1282 = vmatpush2.msra.mxu0 0.0
    %1283 = vmatprep.subr.mxu0 0.0
    %1284 = vmatpush2.msra.mxu0 0.0
    %1285 = vmatprep.subr.mxu0 0.0
    %1286 = vmatpush2.msra.mxu0 0.0
    %1287 = vmatprep.subr.mxu0 0.0
    %1288 = vmatpush2.msra.mxu0 0.0
    %1289 = vmatprep.subr.mxu0 0.0
    %1290 = vmatpush2.msra.mxu0 0.0
    %1291 = vmatprep.mubr.f32.mxu0 0.0
    %1292 = vmatmul.mubr.f32.gmra.mxu0 %v1180
    %v1293 = vpop.f32.mrf.mxu0
    %v1294 = vadd.f32 0.0, %v1293
    %v1295 = vpop.f32.mrf.mxu0
    %1296 = vmatprep.mubr.f32.mxu0 0.0
    %1297 = vmatmul.mubr.f32.gmra.mxu0 %v1183
    %v1298 = vpop.f32.mrf.mxu0
    %v1299 = vadd.f32 0.0, %v1298
    %v1300 = vpop.f32.mrf.mxu0
    %1301 = vmatprep.mubr.f32.mxu0 0.0
    %1302 = vmatmul.mubr.f32.gmra.mxu0 %v1186
    %v1303 = vpop.f32.mrf.mxu0
    %v1304 = vadd.f32 0.0, %v1303
    %v1305 = vpop.f32.mrf.mxu0
    %1306 = vmatprep.mubr.f32.mxu0 0.0
    %1307 = vmatmul.mubr.f32.gmra.mxu0 %v1189
    %v1308 = vpop.f32.mrf.mxu0
    %v1309 = vadd.f32 0.0, %v1308
    %v1310 = vpop.f32.mrf.mxu0
    %1311 = vmatprep.mubr.f32.mxu0 0.0
    %1312 = vmatmul.mubr.f32.gmra.mxu0 %v1192
    %v1313 = vpop.f32.mrf.mxu0
    %v1314 = vadd.f32 0.0, %v1313
    %v1315 = vpop.f32.mrf.mxu0
    %1316 = vmatprep.mubr.f32.mxu0 0.0
    %1317 = vmatmul.mubr.f32.gmra.mxu0 %v1195
    %v1318 = vpop.f32.mrf.mxu0
    %v1319 = vadd.f32 0.0, %v1318
    %v1320 = vpop.f32.mrf.mxu0
    %1321 = vmatprep.mubr.f32.mxu0 0.0
    %1322 = vmatmul.mubr.f32.gmra.mxu0 %v1198
    %v1323 = vpop.f32.mrf.mxu0
    %v1324 = vadd.f32 0.0, %v1323
    %v1325 = vpop.f32.mrf.mxu0
    %1326 = vmatprep.mubr.f32.mxu0 0.0
    %1327 = vmatmul.mubr.f32.gmra.mxu0 %v1201
    %v1328 = vpop.f32.mrf.mxu0
    %v1329 = vadd.f32 0.0, %v1328
    %v1330 = vpop.f32.mrf.mxu0
    %1331 = vmatprep.mubr.f32.mxu0 0.0
    %1332 = vmatmul.mubr.f32.gmra.mxu0 %v1204
    %v1333 = vpop.f32.mrf.mxu0
    %v1334 = vadd.f32 0.0, %v1333
    %v1335 = vpop.f32.mrf.mxu0
    %1336 = vmatprep.mubr.f32.mxu0 0.0
    %1337 = vmatmul.mubr.f32.gmra.mxu0 %v1207
    %v1338 = vpop.f32.mrf.mxu0
    %v1339 = vadd.f32 0.0, %v1338
    %v1340 = vpop.f32.mrf.mxu0
    %1341 = vmatprep.mubr.f32.mxu0 0.0
    %1342 = vmatmul.mubr.f32.gmra.mxu0 %v1210
    %v1343 = vpop.f32.mrf.mxu0
    %v1344 = vadd.f32 0.0, %v1343
    %v1345 = vpop.f32.mrf.mxu0
    %1346 = vmatprep.mubr.f32.mxu0 0.0
    %1347 = vmatmul.mubr.f32.gmra.mxu0 %v1213
    %v1348 = vpop.f32.mrf.mxu0
    %v1349 = vadd.f32 0.0, %v1348
    %v1350 = vpop.f32.mrf.mxu0
    %1351 = vmatprep.mubr.f32.mxu0 0.0
    %1352 = vmatmul.mubr.f32.gmra.mxu0 %v1216
    %v1353 = vpop.f32.mrf.mxu0
    %v1354 = vadd.f32 0.0, %v1353
    %v1355 = vpop.f32.mrf.mxu0
    %1356 = vmatprep.mubr.f32.mxu0 0.0
    %1357 = vmatmul.mubr.f32.gmra.mxu0 %v1219
    %v1358 = vpop.f32.mrf.mxu0
    %v1359 = vadd.f32 0.0, %v1358
    %v1360 = vpop.f32.mrf.mxu0
    %1361 = vmatprep.mubr.f32.mxu0 0.0
    %1362 = vmatmul.mubr.f32.gmra.mxu0 %v1222
    %v1363 = vpop.f32.mrf.mxu0
    %v1364 = vadd.f32 0.0, %v1363
    %v1365 = vpop.f32.mrf.mxu0
    %1366 = vmatprep.mubr.f32.mxu0 0.0
    %1367 = vmatmul.mubr.f32.gmra.mxu0 %v1225
    %v1368 = vpop.f32.mrf.mxu0
    %v1369 = vadd.f32 0.0, %v1368
    %v1370 = vpop.f32.mrf.mxu0
    %1371 = vdwg.mxu0
    %1372 = vmatprep.subr.mxu0 0.0
    %1373 = vmatpush1.msra.mxu0 %v1369
    %1374 = vmatprep.subr.mxu0 0.0
    %1375 = vmatpush1.msra.mxu0 %v1364
    %1376 = vmatprep.subr.mxu0 0.0
    %1377 = vmatpush1.msra.mxu0 %v1359
    %1378 = vmatprep.subr.mxu0 0.0
    %1379 = vmatpush1.msra.mxu0 %v1354
    %1380 = vmatprep.subr.mxu0 0.0
    %1381 = vmatpush1.msra.mxu0 %v1349
    %1382 = vmatprep.subr.mxu0 0.0
    %1383 = vmatpush1.msra.mxu0 %v1344
    %1384 = vmatprep.subr.mxu0 0.0
    %1385 = vmatpush1.msra.mxu0 %v1339
    %1386 = vmatprep.subr.mxu0 0.0
    %1387 = vmatpush1.msra.mxu0 %v1334
    %1388 = vmatprep.subr.mxu0 0.0
    %1389 = vmatpush1.msra.mxu0 %v1329
    %1390 = vmatprep.subr.mxu0 0.0
    %1391 = vmatpush1.msra.mxu0 %v1324
    %1392 = vmatprep.subr.mxu0 0.0
    %1393 = vmatpush1.msra.mxu0 %v1319
    %1394 = vmatprep.subr.mxu0 0.0
    %1395 = vmatpush1.msra.mxu0 %v1314
    %1396 = vmatprep.subr.mxu0 0.0
    %1397 = vmatpush1.msra.mxu0 %v1309
    %1398 = vmatprep.subr.mxu0 0.0
    %1399 = vmatpush1.msra.mxu0 %v1304
    %1400 = vmatprep.subr.mxu0 0.0
    %1401 = vmatpush1.msra.mxu0 %v1299
    %1402 = vmatprep.subr.mxu0 0.0
    %1403 = vmatpush1.msra.mxu0 %v1294
    %1404 = vmatprep.subr.mxu0 0.0
    %1405 = vmatpush2.msra.mxu0 0.0
    %1406 = vmatprep.subr.mxu0 0.0
    %1407 = vmatpush2.msra.mxu0 0.0
    %1408 = vmatprep.subr.mxu0 0.0
    %1409 = vmatpush2.msra.mxu0 0.0
    %1410 = vmatprep.subr.mxu0 0.0
    %1411 = vmatpush2.msra.mxu0 0.0
    %1412 = vmatprep.subr.mxu0 0.0
    %1413 = vmatpush2.msra.mxu0 0.0
    %1414 = vmatprep.subr.mxu0 0.0
    %1415 = vmatpush2.msra.mxu0 0.0
    %1416 = vmatprep.subr.mxu0 0.0
    %1417 = vmatpush2.msra.mxu0 0.0
    %1418 = vmatprep.subr.mxu0 0.0
    %1419 = vmatpush2.msra.mxu0 0.0
    %1420 = vmatprep.subr.mxu0 0.0
    %1421 = vmatpush2.msra.mxu0 0.0
    %1422 = vmatprep.subr.mxu0 0.0
    %1423 = vmatpush2.msra.mxu0 0.0
    %1424 = vmatprep.subr.mxu0 0.0
    %1425 = vmatpush2.msra.mxu0 0.0
    %1426 = vmatprep.subr.mxu0 0.0
    %1427 = vmatpush2.msra.mxu0 0.0
    %1428 = vmatprep.subr.mxu0 0.0
    %1429 = vmatpush2.msra.mxu0 0.0
    %1430 = vmatprep.subr.mxu0 0.0
    %1431 = vmatpush2.msra.mxu0 0.0
    %1432 = vmatprep.subr.mxu0 0.0
    %1433 = vmatpush2.msra.mxu0 0.0
    %1434 = vmatprep.subr.mxu0 0.0
    %1435 = vmatpush2.msra.mxu0 0.0
    %1436 = vmatprep.mubr.f32.mxu0 0.0
    %1437 = vmatmul.mubr.f32.gmra.mxu0 %v52
    %v1438 = vpop.f32.mrf.mxu0
    %v1439 = vadd.f32 0.0, %v1438
    %v1440 = vpop.f32.mrf.mxu0
    %1441 = vmatprep.mubr.f32.mxu0 0.0
    %1442 = vmatmul.mubr.f32.gmra.mxu0 %v53
    %v1443 = vpop.f32.mrf.mxu0
    %v1444 = vadd.f32 0.0, %v1443
    %v1445 = vpop.f32.mrf.mxu0
    %1446 = vmatprep.mubr.f32.mxu0 0.0
    %1447 = vmatmul.mubr.f32.gmra.mxu0 %v54
    %v1448 = vpop.f32.mrf.mxu0
    %v1449 = vadd.f32 0.0, %v1448
    %v1450 = vpop.f32.mrf.mxu0
    %1451 = vmatprep.mubr.f32.mxu0 0.0
    %1452 = vmatmul.mubr.f32.gmra.mxu0 %v55
    %v1453 = vpop.f32.mrf.mxu0
    %v1454 = vadd.f32 0.0, %v1453
    %v1455 = vpop.f32.mrf.mxu0
    %1456 = vmatprep.mubr.f32.mxu0 0.0
    %1457 = vmatmul.mubr.f32.gmra.mxu0 %v56
    %v1458 = vpop.f32.mrf.mxu0
    %v1459 = vadd.f32 0.0, %v1458
    %v1460 = vpop.f32.mrf.mxu0
    %1461 = vmatprep.mubr.f32.mxu0 0.0
    %1462 = vmatmul.mubr.f32.gmra.mxu0 %v57
    %v1463 = vpop.f32.mrf.mxu0
    %v1464 = vadd.f32 0.0, %v1463
    %v1465 = vpop.f32.mrf.mxu0
    %1466 = vmatprep.mubr.f32.mxu0 0.0
    %1467 = vmatmul.mubr.f32.gmra.mxu0 %v58
    %v1468 = vpop.f32.mrf.mxu0
    %v1469 = vadd.f32 0.0, %v1468
    %v1470 = vpop.f32.mrf.mxu0
    %1471 = vmatprep.mubr.f32.mxu0 0.0
    %1472 = vmatmul.mubr.f32.gmra.mxu0 %v59
    %v1473 = vpop.f32.mrf.mxu0
    %v1474 = vadd.f32 0.0, %v1473
    %v1475 = vpop.f32.mrf.mxu0
    %1476 = vmatprep.mubr.f32.mxu0 0.0
    %1477 = vmatmul.mubr.f32.gmra.mxu0 %v60
    %v1478 = vpop.f32.mrf.mxu0
    %v1479 = vadd.f32 0.0, %v1478
    %v1480 = vpop.f32.mrf.mxu0
    %1481 = vmatprep.mubr.f32.mxu0 0.0
    %1482 = vmatmul.mubr.f32.gmra.mxu0 %v61
    %v1483 = vpop.f32.mrf.mxu0
    %v1484 = vadd.f32 0.0, %v1483
    %v1485 = vpop.f32.mrf.mxu0
    %1486 = vmatprep.mubr.f32.mxu0 0.0
    %1487 = vmatmul.mubr.f32.gmra.mxu0 %v62
    %v1488 = vpop.f32.mrf.mxu0
    %v1489 = vadd.f32 0.0, %v1488
    %v1490 = vpop.f32.mrf.mxu0
    %1491 = vmatprep.mubr.f32.mxu0 0.0
    %1492 = vmatmul.mubr.f32.gmra.mxu0 %v63
    %v1493 = vpop.f32.mrf.mxu0
    %v1494 = vadd.f32 0.0, %v1493
    %v1495 = vpop.f32.mrf.mxu0
    %1496 = vmatprep.mubr.f32.mxu0 0.0
    %1497 = vmatmul.mubr.f32.gmra.mxu0 %v64
    %v1498 = vpop.f32.mrf.mxu0
    %v1499 = vadd.f32 0.0, %v1498
    %v1500 = vpop.f32.mrf.mxu0
    %1501 = vmatprep.mubr.f32.mxu0 0.0
    %1502 = vmatmul.mubr.f32.gmra.mxu0 %v65
    %v1503 = vpop.f32.mrf.mxu0
    %v1504 = vadd.f32 0.0, %v1503
    %v1505 = vpop.f32.mrf.mxu0
    %1506 = vmatprep.mubr.f32.mxu0 0.0
    %1507 = vmatmul.mubr.f32.gmra.mxu0 %v66
    %v1508 = vpop.f32.mrf.mxu0
    %v1509 = vadd.f32 0.0, %v1508
    %v1510 = vpop.f32.mrf.mxu0
    %1511 = vmatprep.mubr.f32.mxu0 0.0
    %1512 = vmatmul.mubr.f32.gmra.mxu0 %v67
    %v1513 = vpop.f32.mrf.mxu0
    %v1514 = vadd.f32 0.0, %v1513
    %v1515 = vpop.f32.mrf.mxu0
    %1516 = vdwg.mxu0
    %v1517 = vsub.f32 %v1439, %v761
    %v1518 = vsub.f32 %v1444, %v762
    %v1519 = vsub.f32 %v1449, %v763
    %v1520 = vsub.f32 %v1454, %v764
    %v1521 = vsub.f32 %v1459, %v765
    %v1522 = vsub.f32 %v1464, %v766
    %v1523 = vsub.f32 %v1469, %v767
    %v1524 = vsub.f32 %v1474, %v768
    %v1525 = vsub.f32 %v1479, %v769
    %v1526 = vsub.f32 %v1484, %v770
    %v1527 = vsub.f32 %v1489, %v771
    %v1528 = vsub.f32 %v1494, %v772
    %v1529 = vsub.f32 %v1499, %v773
    %v1530 = vsub.f32 %v1504, %v774
    %v1531 = vsub.f32 %v1509, %v775
    %v1532 = vsub.f32 %v1514, %v776
    %v1533 = vmul.f32 %v18, %v34
    %v1534 = vmul.f32 %v19, %v35
    %v1535 = vmul.f32 %v20, %v36
    %v1536 = vmul.f32 %v21, %v37
    %v1537 = vmul.f32 %v22, %v38
    %v1538 = vmul.f32 %v23, %v39
    %v1539 = vmul.f32 %v24, %v40
    %v1540 = vmul.f32 %v25, %v41
    %v1541 = vmul.f32 %v26, %v42
    %v1542 = vmul.f32 %v27, %v43
    %v1543 = vmul.f32 %v28, %v44
    %v1544 = vmul.f32 %v29, %v45
    %v1545 = vmul.f32 %v30, %v46
    %v1546 = vmul.f32 %v31, %v47
    %v1547 = vmul.f32 %v32, %v48
    %v1548 = vmul.f32 %v33, %v49
    %v1550 = vsel %vm68, %v1533, 0
    %v1553 = vsel %vm68, %v1534, 0
    %v1556 = vsel %vm68, %v1535, 0
    %v1559 = vsel %vm68, %v1536, 0
    %v1562 = vsel %vm68, %v1537, 0
    %v1565 = vsel %vm68, %v1538, 0
    %v1568 = vsel %vm68, %v1539, 0
    %v1571 = vsel %vm68, %v1540, 0
    %v1574 = vsel %vm68, %v1541, 0
    %v1577 = vsel %vm68, %v1542, 0
    %v1580 = vsel %vm68, %v1543, 0
    %v1583 = vsel %vm68, %v1544, 0
    %v1586 = vsel %vm68, %v1545, 0
    %v1589 = vsel %vm68, %v1546, 0
    %v1592 = vsel %vm68, %v1547, 0
    %v1595 = vsel %vm68, %v1548, 0
    %1597 = vmatprep.subr.mxu0 0.0
    %1598 = vmatpush1.msra.mxu0 0.0
    %1599 = vmatprep.subr.mxu0 0.0
    %1600 = vmatpush1.msra.mxu0 0.0
    %1601 = vmatprep.subr.mxu0 0.0
    %1602 = vmatpush1.msra.mxu0 0.0
    %1603 = vmatprep.subr.mxu0 0.0
    %1604 = vmatpush1.msra.mxu0 0.0
    %1605 = vmatprep.subr.mxu0 0.0
    %1606 = vmatpush1.msra.mxu0 0.0
    %1607 = vmatprep.subr.mxu0 0.0
    %1608 = vmatpush1.msra.mxu0 0.0
    %1609 = vmatprep.subr.mxu0 0.0
    %1610 = vmatpush1.msra.mxu0 0.0
    %1611 = vmatprep.subr.mxu0 0.0
    %1612 = vmatpush1.msra.mxu0 0.0
    %1613 = vmatprep.subr.mxu0 0.0
    %1614 = vmatpush1.msra.mxu0 0.0
    %1615 = vmatprep.subr.mxu0 0.0
    %1616 = vmatpush1.msra.mxu0 0.0
    %1617 = vmatprep.subr.mxu0 0.0
    %1618 = vmatpush1.msra.mxu0 0.0
    %1619 = vmatprep.subr.mxu0 0.0
    %1620 = vmatpush1.msra.mxu0 0.0
    %1621 = vmatprep.subr.mxu0 0.0
    %1622 = vmatpush1.msra.mxu0 0.0
    %1623 = vmatprep.subr.mxu0 0.0
    %1624 = vmatpush1.msra.mxu0 0.0
    %1625 = vmatprep.subr.mxu0 0.0
    %1626 = vmatpush1.msra.mxu0 %v51
    %1627 = vmatprep.subr.mxu0 0.0
    %1628 = vmatpush1.msra.mxu0 %v50
    %1629 = vmatprep.subr.mxu0 0.0
    %1630 = vmatpush2.msra.mxu0 0.0
    %1631 = vmatprep.subr.mxu0 0.0
    %1632 = vmatpush2.msra.mxu0 0.0
    %1633 = vmatprep.subr.mxu0 0.0
    %1634 = vmatpush2.msra.mxu0 0.0
    %1635 = vmatprep.subr.mxu0 0.0
    %1636 = vmatpush2.msra.mxu0 0.0
    %1637 = vmatprep.subr.mxu0 0.0
    %1638 = vmatpush2.msra.mxu0 0.0
    %1639 = vmatprep.subr.mxu0 0.0
    %1640 = vmatpush2.msra.mxu0 0.0
    %1641 = vmatprep.subr.mxu0 0.0
    %1642 = vmatpush2.msra.mxu0 0.0
    %1643 = vmatprep.subr.mxu0 0.0
    %1644 = vmatpush2.msra.mxu0 0.0
    %1645 = vmatprep.subr.mxu0 0.0
    %1646 = vmatpush2.msra.mxu0 0.0
    %1647 = vmatprep.subr.mxu0 0.0
    %1648 = vmatpush2.msra.mxu0 0.0
    %1649 = vmatprep.subr.mxu0 0.0
    %1650 = vmatpush2.msra.mxu0 0.0
    %1651 = vmatprep.subr.mxu0 0.0
    %1652 = vmatpush2.msra.mxu0 0.0
    %1653 = vmatprep.subr.mxu0 0.0
    %1654 = vmatpush2.msra.mxu0 0.0
    %1655 = vmatprep.subr.mxu0 0.0
    %1656 = vmatpush2.msra.mxu0 0.0
    %1657 = vmatprep.subr.mxu0 0.0
    %1658 = vmatpush2.msra.mxu0 0.0
    %1659 = vmatprep.subr.mxu0 0.0
    %1660 = vmatpush2.msra.mxu0 0.0
    %1661 = vmatprep.mubr.f32.mxu0 0.0
    %1662 = vmatmul.mubr.f32.gmra.mxu0 %v1550
    %v1663 = vpop.f32.mrf.mxu0
    %v1664 = vadd.f32 0.0, %v1663
    %v1665 = vpop.f32.mrf.mxu0
    %1666 = vmatprep.mubr.f32.mxu0 0.0
    %1667 = vmatmul.mubr.f32.gmra.mxu0 %v1553
    %v1668 = vpop.f32.mrf.mxu0
    %v1669 = vadd.f32 0.0, %v1668
    %v1670 = vpop.f32.mrf.mxu0
    %1671 = vmatprep.mubr.f32.mxu0 0.0
    %1672 = vmatmul.mubr.f32.gmra.mxu0 %v1556
    %v1673 = vpop.f32.mrf.mxu0
    %v1674 = vadd.f32 0.0, %v1673
    %v1675 = vpop.f32.mrf.mxu0
    %1676 = vmatprep.mubr.f32.mxu0 0.0
    %1677 = vmatmul.mubr.f32.gmra.mxu0 %v1559
    %v1678 = vpop.f32.mrf.mxu0
    %v1679 = vadd.f32 0.0, %v1678
    %v1680 = vpop.f32.mrf.mxu0
    %1681 = vmatprep.mubr.f32.mxu0 0.0
    %1682 = vmatmul.mubr.f32.gmra.mxu0 %v1562
    %v1683 = vpop.f32.mrf.mxu0
    %v1684 = vadd.f32 0.0, %v1683
    %v1685 = vpop.f32.mrf.mxu0
    %1686 = vmatprep.mubr.f32.mxu0 0.0
    %1687 = vmatmul.mubr.f32.gmra.mxu0 %v1565
    %v1688 = vpop.f32.mrf.mxu0
    %v1689 = vadd.f32 0.0, %v1688
    %v1690 = vpop.f32.mrf.mxu0
    %1691 = vmatprep.mubr.f32.mxu0 0.0
    %1692 = vmatmul.mubr.f32.gmra.mxu0 %v1568
    %v1693 = vpop.f32.mrf.mxu0
    %v1694 = vadd.f32 0.0, %v1693
    %v1695 = vpop.f32.mrf.mxu0
    %1696 = vmatprep.mubr.f32.mxu0 0.0
    %1697 = vmatmul.mubr.f32.gmra.mxu0 %v1571
    %v1698 = vpop.f32.mrf.mxu0
    %v1699 = vadd.f32 0.0, %v1698
    %v1700 = vpop.f32.mrf.mxu0
    %1701 = vmatprep.mubr.f32.mxu0 0.0
    %1702 = vmatmul.mubr.f32.gmra.mxu0 %v1574
    %v1703 = vpop.f32.mrf.mxu0
    %v1704 = vadd.f32 0.0, %v1703
    %v1705 = vpop.f32.mrf.mxu0
    %1706 = vmatprep.mubr.f32.mxu0 0.0
    %1707 = vmatmul.mubr.f32.gmra.mxu0 %v1577
    %v1708 = vpop.f32.mrf.mxu0
    %v1709 = vadd.f32 0.0, %v1708
    %v1710 = vpop.f32.mrf.mxu0
    %1711 = vmatprep.mubr.f32.mxu0 0.0
    %1712 = vmatmul.mubr.f32.gmra.mxu0 %v1580
    %v1713 = vpop.f32.mrf.mxu0
    %v1714 = vadd.f32 0.0, %v1713
    %v1715 = vpop.f32.mrf.mxu0
    %1716 = vmatprep.mubr.f32.mxu0 0.0
    %1717 = vmatmul.mubr.f32.gmra.mxu0 %v1583
    %v1718 = vpop.f32.mrf.mxu0
    %v1719 = vadd.f32 0.0, %v1718
    %v1720 = vpop.f32.mrf.mxu0
    %1721 = vmatprep.mubr.f32.mxu0 0.0
    %1722 = vmatmul.mubr.f32.gmra.mxu0 %v1586
    %v1723 = vpop.f32.mrf.mxu0
    %v1724 = vadd.f32 0.0, %v1723
    %v1725 = vpop.f32.mrf.mxu0
    %1726 = vmatprep.mubr.f32.mxu0 0.0
    %1727 = vmatmul.mubr.f32.gmra.mxu0 %v1589
    %v1728 = vpop.f32.mrf.mxu0
    %v1729 = vadd.f32 0.0, %v1728
    %v1730 = vpop.f32.mrf.mxu0
    %1731 = vmatprep.mubr.f32.mxu0 0.0
    %1732 = vmatmul.mubr.f32.gmra.mxu0 %v1592
    %v1733 = vpop.f32.mrf.mxu0
    %v1734 = vadd.f32 0.0, %v1733
    %v1735 = vpop.f32.mrf.mxu0
    %1736 = vmatprep.mubr.f32.mxu0 0.0
    %1737 = vmatmul.mubr.f32.gmra.mxu0 %v1595
    %v1738 = vpop.f32.mrf.mxu0
    %v1739 = vadd.f32 0.0, %v1738
    %v1740 = vpop.f32.mrf.mxu0
    %1741 = vdwg.mxu0
    %1742 = vmatprep.subr.mxu0 0.0
    %1743 = vmatpush1.msra.mxu0 %v1739
    %1744 = vmatprep.subr.mxu0 0.0
    %1745 = vmatpush1.msra.mxu0 %v1734
    %1746 = vmatprep.subr.mxu0 0.0
    %1747 = vmatpush1.msra.mxu0 %v1729
    %1748 = vmatprep.subr.mxu0 0.0
    %1749 = vmatpush1.msra.mxu0 %v1724
    %1750 = vmatprep.subr.mxu0 0.0
    %1751 = vmatpush1.msra.mxu0 %v1719
    %1752 = vmatprep.subr.mxu0 0.0
    %1753 = vmatpush1.msra.mxu0 %v1714
    %1754 = vmatprep.subr.mxu0 0.0
    %1755 = vmatpush1.msra.mxu0 %v1709
    %1756 = vmatprep.subr.mxu0 0.0
    %1757 = vmatpush1.msra.mxu0 %v1704
    %1758 = vmatprep.subr.mxu0 0.0
    %1759 = vmatpush1.msra.mxu0 %v1699
    %1760 = vmatprep.subr.mxu0 0.0
    %1761 = vmatpush1.msra.mxu0 %v1694
    %1762 = vmatprep.subr.mxu0 0.0
    %1763 = vmatpush1.msra.mxu0 %v1689
    %1764 = vmatprep.subr.mxu0 0.0
    %1765 = vmatpush1.msra.mxu0 %v1684
    %1766 = vmatprep.subr.mxu0 0.0
    %1767 = vmatpush1.msra.mxu0 %v1679
    %1768 = vmatprep.subr.mxu0 0.0
    %1769 = vmatpush1.msra.mxu0 %v1674
    %1770 = vmatprep.subr.mxu0 0.0
    %1771 = vmatpush1.msra.mxu0 %v1669
    %1772 = vmatprep.subr.mxu0 0.0
    %1773 = vmatpush1.msra.mxu0 %v1664
    %1774 = vmatprep.subr.mxu0 0.0
    %1775 = vmatpush2.msra.mxu0 0.0
    %1776 = vmatprep.subr.mxu0 0.0
    %1777 = vmatpush2.msra.mxu0 0.0
    %1778 = vmatprep.subr.mxu0 0.0
    %1779 = vmatpush2.msra.mxu0 0.0
    %1780 = vmatprep.subr.mxu0 0.0
    %1781 = vmatpush2.msra.mxu0 0.0
    %1782 = vmatprep.subr.mxu0 0.0
    %1783 = vmatpush2.msra.mxu0 0.0
    %1784 = vmatprep.subr.mxu0 0.0
    %1785 = vmatpush2.msra.mxu0 0.0
    %1786 = vmatprep.subr.mxu0 0.0
    %1787 = vmatpush2.msra.mxu0 0.0
    %1788 = vmatprep.subr.mxu0 0.0
    %1789 = vmatpush2.msra.mxu0 0.0
    %1790 = vmatprep.subr.mxu0 0.0
    %1791 = vmatpush2.msra.mxu0 0.0
    %1792 = vmatprep.subr.mxu0 0.0
    %1793 = vmatpush2.msra.mxu0 0.0
    %1794 = vmatprep.subr.mxu0 0.0
    %1795 = vmatpush2.msra.mxu0 0.0
    %1796 = vmatprep.subr.mxu0 0.0
    %1797 = vmatpush2.msra.mxu0 0.0
    %1798 = vmatprep.subr.mxu0 0.0
    %1799 = vmatpush2.msra.mxu0 0.0
    %1800 = vmatprep.subr.mxu0 0.0
    %1801 = vmatpush2.msra.mxu0 0.0
    %1802 = vmatprep.subr.mxu0 0.0
    %1803 = vmatpush2.msra.mxu0 0.0
    %1804 = vmatprep.subr.mxu0 0.0
    %1805 = vmatpush2.msra.mxu0 0.0
    %1806 = vmatprep.mubr.f32.mxu0 0.0
    %1807 = vmatmul.mubr.f32.gmra.mxu0 %v52
    %v1808 = vpop.f32.mrf.mxu0
    %v1809 = vadd.f32 0.0, %v1808
    %v1810 = vpop.f32.mrf.mxu0
    %1811 = vmatprep.mubr.f32.mxu0 0.0
    %1812 = vmatmul.mubr.f32.gmra.mxu0 %v53
    %v1813 = vpop.f32.mrf.mxu0
    %v1814 = vadd.f32 0.0, %v1813
    %v1815 = vpop.f32.mrf.mxu0
    %1816 = vmatprep.mubr.f32.mxu0 0.0
    %1817 = vmatmul.mubr.f32.gmra.mxu0 %v54
    %v1818 = vpop.f32.mrf.mxu0
    %v1819 = vadd.f32 0.0, %v1818
    %v1820 = vpop.f32.mrf.mxu0
    %1821 = vmatprep.mubr.f32.mxu0 0.0
    %1822 = vmatmul.mubr.f32.gmra.mxu0 %v55
    %v1823 = vpop.f32.mrf.mxu0
    %v1824 = vadd.f32 0.0, %v1823
    %v1825 = vpop.f32.mrf.mxu0
    %1826 = vmatprep.mubr.f32.mxu0 0.0
    %1827 = vmatmul.mubr.f32.gmra.mxu0 %v56
    %v1828 = vpop.f32.mrf.mxu0
    %v1829 = vadd.f32 0.0, %v1828
    %v1830 = vpop.f32.mrf.mxu0
    %1831 = vmatprep.mubr.f32.mxu0 0.0
    %1832 = vmatmul.mubr.f32.gmra.mxu0 %v57
    %v1833 = vpop.f32.mrf.mxu0
    %v1834 = vadd.f32 0.0, %v1833
    %v1835 = vpop.f32.mrf.mxu0
    %1836 = vmatprep.mubr.f32.mxu0 0.0
    %1837 = vmatmul.mubr.f32.gmra.mxu0 %v58
    %v1838 = vpop.f32.mrf.mxu0
    %v1839 = vadd.f32 0.0, %v1838
    %v1840 = vpop.f32.mrf.mxu0
    %1841 = vmatprep.mubr.f32.mxu0 0.0
    %1842 = vmatmul.mubr.f32.gmra.mxu0 %v59
    %v1843 = vpop.f32.mrf.mxu0
    %v1844 = vadd.f32 0.0, %v1843
    %v1845 = vpop.f32.mrf.mxu0
    %1846 = vmatprep.mubr.f32.mxu0 0.0
    %1847 = vmatmul.mubr.f32.gmra.mxu0 %v60
    %v1848 = vpop.f32.mrf.mxu0
    %v1849 = vadd.f32 0.0, %v1848
    %v1850 = vpop.f32.mrf.mxu0
    %1851 = vmatprep.mubr.f32.mxu0 0.0
    %1852 = vmatmul.mubr.f32.gmra.mxu0 %v61
    %v1853 = vpop.f32.mrf.mxu0
    %v1854 = vadd.f32 0.0, %v1853
    %v1855 = vpop.f32.mrf.mxu0
    %1856 = vmatprep.mubr.f32.mxu0 0.0
    %1857 = vmatmul.mubr.f32.gmra.mxu0 %v62
    %v1858 = vpop.f32.mrf.mxu0
    %v1859 = vadd.f32 0.0, %v1858
    %v1860 = vpop.f32.mrf.mxu0
    %1861 = vmatprep.mubr.f32.mxu0 0.0
    %1862 = vmatmul.mubr.f32.gmra.mxu0 %v63
    %v1863 = vpop.f32.mrf.mxu0
    %v1864 = vadd.f32 0.0, %v1863
    %v1865 = vpop.f32.mrf.mxu0
    %1866 = vmatprep.mubr.f32.mxu0 0.0
    %1867 = vmatmul.mubr.f32.gmra.mxu0 %v64
    %v1868 = vpop.f32.mrf.mxu0
    %v1869 = vadd.f32 0.0, %v1868
    %v1870 = vpop.f32.mrf.mxu0
    %1871 = vmatprep.mubr.f32.mxu0 0.0
    %1872 = vmatmul.mubr.f32.gmra.mxu0 %v65
    %v1873 = vpop.f32.mrf.mxu0
    %v1874 = vadd.f32 0.0, %v1873
    %v1875 = vpop.f32.mrf.mxu0
    %1876 = vmatprep.mubr.f32.mxu0 0.0
    %1877 = vmatmul.mubr.f32.gmra.mxu0 %v66
    %v1878 = vpop.f32.mrf.mxu0
    %v1879 = vadd.f32 0.0, %v1878
    %v1880 = vpop.f32.mrf.mxu0
    %1881 = vmatprep.mubr.f32.mxu0 0.0
    %1882 = vmatmul.mubr.f32.gmra.mxu0 %v67
    %v1883 = vpop.f32.mrf.mxu0
    %v1884 = vadd.f32 0.0, %v1883
    %v1885 = vpop.f32.mrf.mxu0
    %1886 = vdwg.mxu0
    %v1887 = vsub.f32 %v1809, %v777
    %v1888 = vsub.f32 %v1814, %v778
    %v1889 = vsub.f32 %v1819, %v779
    %v1890 = vsub.f32 %v1824, %v780
    %v1891 = vsub.f32 %v1829, %v781
    %v1892 = vsub.f32 %v1834, %v782
    %v1893 = vsub.f32 %v1839, %v783
    %v1894 = vsub.f32 %v1844, %v784
    %v1895 = vsub.f32 %v1849, %v785
    %v1896 = vsub.f32 %v1854, %v786
    %v1897 = vsub.f32 %v1859, %v787
    %v1898 = vsub.f32 %v1864, %v788
    %v1899 = vsub.f32 %v1869, %v789
    %v1900 = vsub.f32 %v1874, %v790
    %v1901 = vsub.f32 %v1879, %v791
    %v1902 = vsub.f32 %v1884, %v792
    %v1903 = vmul.f32 %v777, 2.0
    %v1904 = vmul.f32 %v778, 2.0
    %v1905 = vmul.f32 %v779, 2.0
    %v1906 = vmul.f32 %v780, 2.0
    %v1907 = vmul.f32 %v781, 2.0
    %v1908 = vmul.f32 %v782, 2.0
    %v1909 = vmul.f32 %v783, 2.0
    %v1910 = vmul.f32 %v784, 2.0
    %v1911 = vmul.f32 %v785, 2.0
    %v1912 = vmul.f32 %v786, 2.0
    %v1913 = vmul.f32 %v787, 2.0
    %v1914 = vmul.f32 %v788, 2.0
    %v1915 = vmul.f32 %v789, 2.0
    %v1916 = vmul.f32 %v790, 2.0
    %v1917 = vmul.f32 %v791, 2.0
    %v1918 = vmul.f32 %v792, 2.0
    %v1919 = vadd.f32 %v1903, 0.0001
    %v1920 = vadd.f32 %v1904, 0.0001
    %v1921 = vadd.f32 %v1905, 0.0001
    %v1922 = vadd.f32 %v1906, 0.0001
    %v1923 = vadd.f32 %v1907, 0.0001
    %v1924 = vadd.f32 %v1908, 0.0001
    %v1925 = vadd.f32 %v1909, 0.0001
    %v1926 = vadd.f32 %v1910, 0.0001
    %v1927 = vadd.f32 %v1911, 0.0001
    %v1928 = vadd.f32 %v1912, 0.0001
    %v1929 = vadd.f32 %v1913, 0.0001
    %v1930 = vadd.f32 %v1914, 0.0001
    %v1931 = vadd.f32 %v1915, 0.0001
    %v1932 = vadd.f32 %v1916, 0.0001
    %v1933 = vadd.f32 %v1917, 0.0001
    %v1934 = vadd.f32 %v1918, 0.0001
    %v1935 = vmul.f32 %v1887, 2.0
    %v1936 = vmul.f32 %v1888, 2.0
    %v1937 = vmul.f32 %v1889, 2.0
    %v1938 = vmul.f32 %v1890, 2.0
    %v1939 = vmul.f32 %v1891, 2.0
    %v1940 = vmul.f32 %v1892, 2.0
    %v1941 = vmul.f32 %v1893, 2.0
    %v1942 = vmul.f32 %v1894, 2.0
    %v1943 = vmul.f32 %v1895, 2.0
    %v1944 = vmul.f32 %v1896, 2.0
    %v1945 = vmul.f32 %v1897, 2.0
    %v1946 = vmul.f32 %v1898, 2.0
    %v1947 = vmul.f32 %v1899, 2.0
    %v1948 = vmul.f32 %v1900, 2.0
    %v1949 = vmul.f32 %v1901, 2.0
    %v1950 = vmul.f32 %v1902, 2.0
    %v1951 = vadd.f32 %v1935, 0.0009
    %v1952 = vadd.f32 %v1936, 0.0009
    %v1953 = vadd.f32 %v1937, 0.0009
    %v1954 = vadd.f32 %v1938, 0.0009
    %v1955 = vadd.f32 %v1939, 0.0009
    %v1956 = vadd.f32 %v1940, 0.0009
    %v1957 = vadd.f32 %v1941, 0.0009
    %v1958 = vadd.f32 %v1942, 0.0009
    %v1959 = vadd.f32 %v1943, 0.0009
    %v1960 = vadd.f32 %v1944, 0.0009
    %v1961 = vadd.f32 %v1945, 0.0009
    %v1962 = vadd.f32 %v1946, 0.0009
    %v1963 = vadd.f32 %v1947, 0.0009
    %v1964 = vadd.f32 %v1948, 0.0009
    %v1965 = vadd.f32 %v1949, 0.0009
    %v1966 = vadd.f32 %v1950, 0.0009
    %v1967 = vmul.f32 %v1919, %v1951
    %v1968 = vmul.f32 %v1920, %v1952
    %v1969 = vmul.f32 %v1921, %v1953
    %v1970 = vmul.f32 %v1922, %v1954
    %v1971 = vmul.f32 %v1923, %v1955
    %v1972 = vmul.f32 %v1924, %v1956
    %v1973 = vmul.f32 %v1925, %v1957
    %v1974 = vmul.f32 %v1926, %v1958
    %v1975 = vmul.f32 %v1927, %v1959
    %v1976 = vmul.f32 %v1928, %v1960
    %v1977 = vmul.f32 %v1929, %v1961
    %v1978 = vmul.f32 %v1930, %v1962
    %v1979 = vmul.f32 %v1931, %v1963
    %v1980 = vmul.f32 %v1932, %v1964
    %v1981 = vmul.f32 %v1933, %v1965
    %v1982 = vmul.f32 %v1934, %v1966
    %v1983 = vadd.f32 %v745, %v761
    %v1984 = vadd.f32 %v746, %v762
    %v1985 = vadd.f32 %v747, %v763
    %v1986 = vadd.f32 %v748, %v764
    %v1987 = vadd.f32 %v749, %v765
    %v1988 = vadd.f32 %v750, %v766
    %v1989 = vadd.f32 %v751, %v767
    %v1990 = vadd.f32 %v752, %v768
    %v1991 = vadd.f32 %v753, %v769
    %v1992 = vadd.f32 %v754, %v770
    %v1993 = vadd.f32 %v755, %v771
    %v1994 = vadd.f32 %v756, %v772
    %v1995 = vadd.f32 %v757, %v773
    %v1996 = vadd.f32 %v758, %v774
    %v1997 = vadd.f32 %v759, %v775
    %v1998 = vadd.f32 %v760, %v776
    %v1999 = vadd.f32 %v1983, 0.0001
    %v2000 = vadd.f32 %v1984, 0.0001
    %v2001 = vadd.f32 %v1985, 0.0001
    %v2002 = vadd.f32 %v1986, 0.0001
    %v2003 = vadd.f32 %v1987, 0.0001
    %v2004 = vadd.f32 %v1988, 0.0001
    %v2005 = vadd.f32 %v1989, 0.0001
    %v2006 = vadd.f32 %v1990, 0.0001
    %v2007 = vadd.f32 %v1991, 0.0001
    %v2008 = vadd.f32 %v1992, 0.0001
    %v2009 = vadd.f32 %v1993, 0.0001
    %v2010 = vadd.f32 %v1994, 0.0001
    %v2011 = vadd.f32 %v1995, 0.0001
    %v2012 = vadd.f32 %v1996, 0.0001
    %v2013 = vadd.f32 %v1997, 0.0001
    %v2014 = vadd.f32 %v1998, 0.0001
    %v2015 = vadd.f32 %v1147, %v1517
    %v2016 = vadd.f32 %v1148, %v1518
    %v2017 = vadd.f32 %v1149, %v1519
    %v2018 = vadd.f32 %v1150, %v1520
    %v2019 = vadd.f32 %v1151, %v1521
    %v2020 = vadd.f32 %v1152, %v1522
    %v2021 = vadd.f32 %v1153, %v1523
    %v2022 = vadd.f32 %v1154, %v1524
    %v2023 = vadd.f32 %v1155, %v1525
    %v2024 = vadd.f32 %v1156, %v1526
    %v2025 = vadd.f32 %v1157, %v1527
    %v2026 = vadd.f32 %v1158, %v1528
    %v2027 = vadd.f32 %v1159, %v1529
    %v2028 = vadd.f32 %v1160, %v1530
    %v2029 = vadd.f32 %v1161, %v1531
    %v2030 = vadd.f32 %v1162, %v1532
    %v2031 = vadd.f32 %v2015, 0.0009
    %v2032 = vadd.f32 %v2016, 0.0009
    %v2033 = vadd.f32 %v2017, 0.0009
    %v2034 = vadd.f32 %v2018, 0.0009
    %v2035 = vadd.f32 %v2019, 0.0009
    %v2036 = vadd.f32 %v2020, 0.0009
    %v2037 = vadd.f32 %v2021, 0.0009
    %v2038 = vadd.f32 %v2022, 0.0009
    %v2039 = vadd.f32 %v2023, 0.0009
    %v2040 = vadd.f32 %v2024, 0.0009
    %v2041 = vadd.f32 %v2025, 0.0009
    %v2042 = vadd.f32 %v2026, 0.0009
    %v2043 = vadd.f32 %v2027, 0.0009
    %v2044 = vadd.f32 %v2028, 0.0009
    %v2045 = vadd.f32 %v2029, 0.0009
    %v2046 = vadd.f32 %v2030, 0.0009
    %v2047 = vmul.f32 %v1999, %v2031
    %v2048 = vmul.f32 %v2000, %v2032
    %v2049 = vmul.f32 %v2001, %v2033
    %v2050 = vmul.f32 %v2002, %v2034
    %v2051 = vmul.f32 %v2003, %v2035
    %v2052 = vmul.f32 %v2004, %v2036
    %v2053 = vmul.f32 %v2005, %v2037
    %v2054 = vmul.f32 %v2006, %v2038
    %v2055 = vmul.f32 %v2007, %v2039
    %v2056 = vmul.f32 %v2008, %v2040
    %v2057 = vmul.f32 %v2009, %v2041
    %v2058 = vmul.f32 %v2010, %v2042
    %v2059 = vmul.f32 %v2011, %v2043
    %v2060 = vmul.f32 %v2012, %v2044
    %v2061 = vmul.f32 %v2013, %v2045
    %v2062 = vmul.f32 %v2014, %v2046
    %v2063 = vrcp.pop %v2047
    %v2064 = vmul.f32 %v1967, %v2063
    %v2065 = vrcp.pop %v2048
    %v2066 = vmul.f32 %v1968, %v2065
    %v2067 = vrcp.pop %v2049
    %v2068 = vmul.f32 %v1969, %v2067
    %v2069 = vrcp.pop %v2050
    %v2070 = vmul.f32 %v1970, %v2069
    %v2071 = vrcp.pop %v2051
    %v2072 = vmul.f32 %v1971, %v2071
    %v2073 = vrcp.pop %v2052
    %v2074 = vmul.f32 %v1972, %v2073
    %v2075 = vrcp.pop %v2053
    %v2076 = vmul.f32 %v1973, %v2075
    %v2077 = vrcp.pop %v2054
    %v2078 = vmul.f32 %v1974, %v2077
    %v2079 = vrcp.pop %v2055
    %v2080 = vmul.f32 %v1975, %v2079
    %v2081 = vrcp.pop %v2056
    %v2082 = vmul.f32 %v1976, %v2081
    %v2083 = vrcp.pop %v2057
    %v2084 = vmul.f32 %v1977, %v2083
    %v2085 = vrcp.pop %v2058
    %v2086 = vmul.f32 %v1978, %v2085
    %v2087 = vrcp.pop %v2059
    %v2088 = vmul.f32 %v1979, %v2087
    %v2089 = vrcp.pop %v2060
    %v2090 = vmul.f32 %v1980, %v2089
    %v2091 = vrcp.pop %v2061
    %v2092 = vmul.f32 %v1981, %v2091
    %v2093 = vrcp.pop %v2062
    %v2094 = vmul.f32 %v1982, %v2093
    %v2095 = vsel %vm68, %v2064, 0.0
    %v2096 = vsel %vm68, %v2066, 0.0
    %v2097 = vadd.f32 %v2095, %v2096
    %v2098 = vsel %vm68, %v2068, 0.0
    %v2099 = vadd.f32 %v2097, %v2098
    %v2100 = vsel %vm68, %v2070, 0.0
    %v2101 = vadd.f32 %v2099, %v2100
    %v2102 = vsel %vm68, %v2072, 0.0
    %v2103 = vadd.f32 %v2101, %v2102
    %v2104 = vsel %vm68, %v2074, 0.0
    %v2105 = vadd.f32 %v2103, %v2104
    %v2106 = vsel %vm68, %v2076, 0.0
    %v2107 = vadd.f32 %v2105, %v2106
    %v2108 = vsel %vm68, %v2078, 0.0
    %v2109 = vadd.f32 %v2107, %v2108
    %v2110 = vsel %vm68, %v2080, 0.0
    %v2111 = vadd.f32 %v2109, %v2110
    %v2112 = vsel %vm68, %v2082, 0.0
    %v2113 = vadd.f32 %v2111, %v2112
    %v2114 = vsel %vm68, %v2084, 0.0
    %v2115 = vadd.f32 %v2113, %v2114
    %v2116 = vsel %vm68, %v2086, 0.0
    %v2117 = vadd.f32 %v2115, %v2116
    %v2118 = vsel %vm68, %v2088, 0.0
    %v2119 = vadd.f32 %v2117, %v2118
    %v2120 = vsel %vm68, %v2090, 0.0
    %v2121 = vadd.f32 %v2119, %v2120
    %v2122 = vsel %vm68, %v2092, 0.0
    %v2123 = vadd.f32 %v2121, %v2122
    %v2124 = vsel %vm68, %v2094, 0.0
    %v2125 = vadd.f32 %v2123, %v2124
    %2126 = vadd.xlane.f32.xlu0 %v2125
    %v2127 = vpop.xlane.xlu0 %2126
    %v2128 = vrot.slane %v2127, 4
    %v2129 = vadd.f32 %v2127, %v2128
    %v2130 = vrot.slane %v2129, 2
    %v2131 = vadd.f32 %v2129, %v2130
    %v2132 = vrot.slane %v2131, 1
    %v2133 = vadd.f32 %v2131, %v2132
    %s2134 = vtos %v2133
    %v2135 = vstv %s2134
    %2136 = vst [vmem:[#allocation2] sm:$0xff] %v2135
    // Predicated region
    $region18: #{tpu_custom_call.1} parent=1 // pred_check
      _
    $region19: #{tpu_custom_call.1} parent=1 // pred_check_branch
      %2138 = sbr.rel (0) target = $region21
    $region20: #{tpu_custom_call.1} parent=1 // pred_region
      %s2140 = ssub.s32 128, 128
      %2141 = vsyncadd [#allocation3], %s2140
      %s2143 = sshll.u32 [#allocation2], 4
      %s2144 = int_to_ptr.vmem [resolvable:$true] %s2143
      %2146 = dma.vmem_to_hbm [thread:$0]  %s2144, 128, %s4, [#allocation3]
    $region21: #{tpu_custom_call.1} parent=1 // pred_fallthru
      _
    // Predicated region
    $region22: #{tpu_custom_call.1} parent=1 // pred_check
      _
    $region23: #{tpu_custom_call.1} parent=1 // pred_check_branch
      %2148 = sbr.rel (0) target = $region25
    $region24: #{tpu_custom_call.1} parent=1 // pred_region
      %2149 = dma.done [#allocation3], 128
    $region25: #{tpu_custom_call.1} parent=1 // pred_fallthru
      _
    %2150 = vsyncpa [#allocation3], 1

</llo_original>
